<compile_context>
chip_gen: v7x
topology: tpu7x:2x2x1
jax: 0.10.0
libtpu: 0.0.40
codegen_flags: <defaults>
</compile_context>

<pallas_src>
import functools

import jax
import jax.numpy as jnp
from jax.experimental import pallas as pl
from jax.experimental.pallas import tpu as pltpu

LEAKY_SLOPE = 0.9  # matches nn.LeakyReLU(0.9) in the reference module


def _leaky(x):
    return jnp.where(x >= 0, x, LEAKY_SLOPE * x)


def _round_up(n, m):
    return ((n + m - 1) // m) * m


# ----------------------------------------------------------------------------
# Kernel 1: fused conv1 + LeakyReLU + conv2 + LeakyReLU (one batch row / step)
# ----------------------------------------------------------------------------
def conv_stack_kernel(x_ref, w1_ref, b1_ref, w2_ref, b2_ref, o_ref):
    # x_ref : (1, 5, T2, C_in) bf16 -- taps x[4s-1], x[4s], x[4s+1], x[4s+2], x[4s+3]
    # w1_ref: (3, C_in, Lp)    bf16   (conv1 weight, per kernel tap, out-padded)
    # b1_ref: (1, Lp)          f32
    # w2_ref: (3, Lp, L2p)     bf16
    # b2_ref: (1, L2p)         f32
    # o_ref : (1, T2, L2p)     bf16   (conv2 output, time-major, lane-dense)
    x = x_ref[0]                                   # (5, T2, C_in)
    xm1, x0, x1, x2, x3 = x[0], x[1], x[2], x[3], x[4]
    w10, w11, w12 = w1_ref[0], w1_ref[1], w1_ref[2]
    b1 = b1_ref[...]

    # conv1 (k=3, stride=2, pad=1) split into even/odd output time positions:
    #   h[2s]   = W0.x[4s-1] + W1.x[4s]   + W2.x[4s+1]
    #   h[2s+1] = W0.x[4s+1] + W1.x[4s+2] + W2.x[4s+3]
    he = jnp.dot(xm1, w10, preferred_element_type=jnp.float32)
    he = he + jnp.dot(x0, w11, preferred_element_type=jnp.float32)
    he = he + jnp.dot(x1, w12, preferred_element_type=jnp.float32)
    he = _leaky(he + b1)                           # (T2, Lp) f32 == h[2s]

    ho = jnp.dot(x1, w10, preferred_element_type=jnp.float32)
    ho = ho + jnp.dot(x2, w11, preferred_element_type=jnp.float32)
    ho = ho + jnp.dot(x3, w12, preferred_element_type=jnp.float32)
    ho = _leaky(ho + b1)                           # (T2, Lp) f32 == h[2s+1]

    # conv2: y[s] = V0.h[2s-1] + V1.h[2s] + V2.h[2s+1];  h[2s-1] = ho[s-1], h[-1]=0
    ho_prev = pltpu.roll(ho, shift=1, axis=0)      # XLU sublane roll (cheap)
    row = jax.lax.broadcasted_iota(jnp.int32, ho_prev.shape, 0)
    ho_prev = jnp.where(row >= 1, ho_prev, 0.0)

    y = jnp.dot(ho_prev.astype(jnp.bfloat16), w2_ref[0],
                preferred_element_type=jnp.float32)
    y = y + jnp.dot(he.astype(jnp.bfloat16), w2_ref[1],
                    preferred_element_type=jnp.float32)
    y = y + jnp.dot(ho.astype(jnp.bfloat16), w2_ref[2],
                    preferred_element_type=jnp.float32)
    y = _leaky(y + b2_ref[...])                    # (T2, L2p) f32
    o_ref[0] = y.astype(o_ref.dtype)


# ----------------------------------------------------------------------------
# Kernel 2: linear3 + LeakyReLU + classifier + LeakyReLU + LogSoftmax
#           (rows "parallel", K axis "arbitrary" with f32 accumulator)
# ----------------------------------------------------------------------------
def head_kernel(x_ref, w3_ref, b3_ref, wc_ref, bc_ref, o_ref, acc_ref, *,
                num_class):
    # x_ref : (Bb, Kt)  bf16   flattened conv features (K-tile)
    # w3_ref: (Kt, Lp)  bf16
    # b3_ref: (1, Lp)   f32
    # wc_ref: (Lp, Cp)  bf16
    # bc_ref: (1, Cp)   f32
    # o_ref : (Bb, Cp)  f32    (padded classes sliced off by the wrapper)
    # acc_ref: (Bb, Lp) f32    first-matmul accumulator
    k = pl.program_id(1)

    @pl.when(k == 0)
    def _():
        acc_ref[...] = jnp.zeros_like(acc_ref)

    acc_ref[...] += jnp.dot(x_ref[...], w3_ref[...],
                            preferred_element_type=jnp.float32)

    @pl.when(k == pl.num_programs(1) - 1)
    def _():
        y = _leaky(acc_ref[...] + b3_ref[...])                      # (Bb, Lp) f32
        z = jnp.dot(y.astype(jnp.bfloat16), wc_ref[...],
                    preferred_element_type=jnp.float32)
        z = _leaky(z + bc_ref[...])                                 # (Bb, Cp) f32
        lane = jax.lax.broadcasted_iota(jnp.int32, z.shape, 1)
        z = jnp.where(lane < num_class, z, -1e30)                   # mask pad classes
        m = jnp.max(z, axis=1, keepdims=True)
        lse = m + jnp.log(jnp.sum(jnp.exp(z - m), axis=1, keepdims=True))
        o_ref[...] = z - lse


# ----------------------------------------------------------------------------
# Parameters (PyTorch layouts), pure-JAX reference, and the Pallas forward
# ----------------------------------------------------------------------------
def init_params(key, input_size, latent_size, num_class, max_len):
    ks = jax.random.split(key, 8)
    L = latent_size
    flat_in = 2 * L * (max_len // 4)

    def rn(k, shape, scale=0.1):
        return (scale * jax.random.normal(k, shape)).astype(jnp.float32)

    return {
        "conv1_w": rn(ks[0], (L, input_size, 3)),      # torch Conv1d (C_out, C_in, K)
        "conv1_b": rn(ks[1], (L,)),
        "conv2_w": rn(ks[2], (2 * L, L, 3)),
        "conv2_b": rn(ks[3], (2 * L,)),
        "w3": rn(ks[4], (L, flat_in)),                 # torch Linear (out, in)
        "b3": rn(ks[5], (L,)),
        "wc": rn(ks[6], (num_class, L)),
        "bc": rn(ks[7], (num_class,)),
    }


@jax.jit
def reference_forward(x, params):
    xt = jnp.transpose(x, (0, 2, 1))                   # (B, C, T)

    def conv1d(h, w, b):
        out = jax.lax.conv_general_dilated(
            h, w, window_strides=(2,), padding=[(1, 1)],
            dimension_numbers=("NCH", "OIH", "NCH"))
        return out + b[None, :, None]

    h = _leaky(conv1d(xt, params["conv1_w"], params["conv1_b"]))
    h = _leaky(conv1d(h, params["conv2_w"], params["conv2_b"]))
    flat = h.reshape(h.shape[0], -1)
    y = _leaky(flat @ params["w3"].T + params["b3"])
    z = _leaky(y @ params["wc"].T + params["bc"])
    return jax.nn.log_softmax(z, axis=1)


@jax.jit
def cnn_forward(x, params):
    B, T, C = x.shape
    L = params["conv1_w"].shape[0]
    num_class = params["wc"].shape[0]
    if T % 4 != 0:
        raise ValueError("max_len must be divisible by 4")
    T2 = T // 4                                        # conv2 output length
    L2 = 2 * L
    Lp = _round_up(L, 128)
    L2p = _round_up(L2, 128)
    Cp = _round_up(num_class, 128)

    # ---- weight prep: transpose to (in, out), zero-pad to lane-dense, bf16 MXU operands
    w1 = jnp.pad(jnp.transpose(params["conv1_w"], (2, 1, 0)),
                 ((0, 0), (0, 0), (0, Lp - L))).astype(jnp.bfloat16)        # (3, C, Lp)
    b1 = jnp.pad(params["conv1_b"], (0, Lp - L)).reshape(1, Lp)
    w2 = jnp.pad(jnp.transpose(params["conv2_w"], (2, 1, 0)),
                 ((0, 0), (0, Lp - L), (0, L2p - L2))).astype(jnp.bfloat16)  # (3, Lp, L2p)
    b2 = jnp.pad(params["conv2_b"], (0, L2p - L2)).reshape(1, L2p)
    # torch flattens conv2 output as (channel, time); reorder W3 columns to the kernel's
    # (time, padded-channel) flatten order so semantics match exactly.
    w3 = params["w3"].reshape(L, L2, T2)
    w3 = jnp.transpose(w3, (2, 1, 0))                                        # (T2, 2L, L)
    w3 = jnp.pad(w3, ((0, 0), (0, L2p - L2), (0, Lp - L)))
    w3 = w3.reshape(T2 * L2p, Lp).astype(jnp.bfloat16)
    b3 = jnp.pad(params["b3"], (0, Lp - L)).reshape(1, Lp)
    wc = jnp.pad(params["wc"].T,
                 ((0, Lp - L), (0, Cp - num_class))).astype(jnp.bfloat16)    # (Lp, Cp)
    bc = jnp.pad(params["bc"], (0, Cp - num_class)).reshape(1, Cp)

    # ---- 5 strided input taps (no K*C im2col tensor in HBM; ~1.25x the input)
    xb = x.astype(jnp.bfloat16)
    x_ext = jnp.concatenate([jnp.zeros((B, 1, C), xb.dtype), xb], axis=1)    # left pad
    taps = jnp.stack([x_ext[:, 0:T:4, :],       # x[4s-1] (zero at s=0)
                      xb[:, 0::4, :],           # x[4s]
                      xb[:, 1::4, :],           # x[4s+1]
                      xb[:, 2::4, :],           # x[4s+2]
                      xb[:, 3::4, :]], axis=1)  # (B, 5, T2, C)

    conv_out = pl.pallas_call(
        conv_stack_kernel,
        out_shape=jax.ShapeDtypeStruct((B, T2, L2p), jnp.bfloat16),
        grid=(B,),
        in_specs=[
            pl.BlockSpec((1, 5, T2, C), lambda b: (b, 0, 0, 0)),
            pl.BlockSpec((3, C, Lp), lambda b: (0, 0, 0)),
            pl.BlockSpec((1, Lp), lambda b: (0, 0)),
            pl.BlockSpec((3, Lp, L2p), lambda b: (0, 0, 0)),
            pl.BlockSpec((1, L2p), lambda b: (0, 0)),
        ],
        out_specs=pl.BlockSpec((1, T2, L2p), lambda b: (b, 0, 0)),
        compiler_params=pltpu.CompilerParams(
            dimension_semantics=("parallel",),
            vmem_limit_bytes=32 * 1024 * 1024),
    )(taps, w1, b1, w2, b2)

    # ---- head: (B, T2*L2p) @ (T2*L2p, Lp), K-tiled + accumulator, then classifier
    Fp = T2 * L2p
    x_flat = conv_out.reshape(B, Fp)                 # free contiguous reshape
    Kt = next((c for c in (512, 256, 128) if Fp % c == 0), Fp)
    Bb = next((c for c in (256, 128, 64, 32, 16, 8) if B % c == 0), B)

    out_pad = pl.pallas_call(
        functools.partial(head_kernel, num_class=num_class),
        out_shape=jax.ShapeDtypeStruct((B, Cp), jnp.float32),
        grid=(B // Bb, Fp // Kt),
        in_specs=[
            pl.BlockSpec((Bb, Kt), lambda i, k: (i, k)),
            pl.BlockSpec((Kt, Lp), lambda i, k: (k, 0)),
            pl.BlockSpec((1, Lp), lambda i, k: (0, 0)),
            pl.BlockSpec((Lp, Cp), lambda i, k: (0, 0)),
            pl.BlockSpec((1, Cp), lambda i, k: (0, 0)),
        ],
        out_specs=pl.BlockSpec((Bb, Cp), lambda i, k: (i, 0)),
        scratch_shapes=[pltpu.VMEM((Bb, Lp), jnp.float32)],
        compiler_params=pltpu.CompilerParams(
            dimension_semantics=("parallel", "arbitrary"),
            vmem_limit_bytes=32 * 1024 * 1024),
    )(x_flat, w3, b3, wc, bc)

    return out_pad[:, :num_class]


if __name__ == "__main__":
    B = 2
    input_size = 6
    latent_size = 16
    num_class = 10
    max_len = 32

    key = jax.random.PRNGKey(0)
    kx, kp = jax.random.split(key)
    x = jax.random.normal(kx, (B, max_len, input_size), dtype=jnp.float32)
    params = init_params(kp, input_size, latent_size, num_class, max_len)

    out = cnn_forward(x, params)
    out = jax.block_until_ready(out)

    ref = reference_forward(x, params)

    assert out.shape == (B, num_class)
    assert bool(jnp.all(jnp.isfinite(out)))
    # log-softmax rows sum to 1 after exp
    assert bool(jnp.allclose(jnp.exp(out).sum(axis=1), 1.0, atol=1e-4))
    # matches the pure-JAX (f32) reference up to bf16 matmul error
    max_err = float(jnp.max(jnp.abs(out - ref)))
    assert bool(jnp.allclose(out, ref, atol=5e-2, rtol=5e-2)), max_err
    print("KERNEL_OK")
</pallas_src>

<mosaic_0001>
module attributes {stable_mosaic.version = 11 : i64} {
  func.func @conv_stack_kernel(%arg0: i32, %arg1: memref<1x5x8x6xbf16, #tpu.memory_space<vmem>>, %arg2: memref<3x6x128xbf16, #tpu.memory_space<vmem>>, %arg3: memref<1x128xf32, #tpu.memory_space<vmem>>, %arg4: memref<3x128x128xbf16, #tpu.memory_space<vmem>>, %arg5: memref<1x128xf32, #tpu.memory_space<vmem>>, %arg6: memref<1x8x128xbf16, #tpu.memory_space<vmem>>) attributes {dimension_semantics = [#tpu.dimension_semantics<parallel>], iteration_bounds = array<i64: 2>, scalar_prefetch = 0 : i64, scratch_operands = 0 : i64, tpu.core_type = #tpu.core_type<tc>, window_params = [{transform_indices = @transform_0, window_bounds = array<i64: 1, 5, 8, 6>}, {pipeline_mode = #tpu.pipeline_mode<synchronous>, transform_indices = @transform_1, window_bounds = array<i64: 3, 6, 128>}, {pipeline_mode = #tpu.pipeline_mode<synchronous>, transform_indices = @transform_2, window_bounds = array<i64: 1, 128>}, {pipeline_mode = #tpu.pipeline_mode<synchronous>, transform_indices = @transform_3, window_bounds = array<i64: 3, 128, 128>}, {pipeline_mode = #tpu.pipeline_mode<synchronous>, transform_indices = @transform_4, window_bounds = array<i64: 1, 128>}, {transform_indices = @transform_5, window_bounds = array<i64: 1, 8, 128>}]} {
    %c0 = arith.constant 0 : index
    %c0_0 = arith.constant 0 : index
    %c0_1 = arith.constant 0 : index
    %c0_2 = arith.constant 0 : index
    %0 = vector.load %arg1[%c0, %c0_0, %c0_1, %c0_2] : memref<1x5x8x6xbf16, #tpu.memory_space<vmem>>, vector<1x5x8x6xbf16>
    %1 = vector.shape_cast %0 : vector<1x5x8x6xbf16> to vector<5x8x6xbf16>
    %2 = vector.extract_strided_slice %1 {offsets = [0, 0, 0], sizes = [1, 8, 6], strides = [1, 1, 1]} : vector<5x8x6xbf16> to vector<1x8x6xbf16>
    %3 = vector.shape_cast %2 : vector<1x8x6xbf16> to vector<8x6xbf16>
    %4 = vector.extract_strided_slice %1 {offsets = [1, 0, 0], sizes = [1, 8, 6], strides = [1, 1, 1]} : vector<5x8x6xbf16> to vector<1x8x6xbf16>
    %5 = vector.shape_cast %4 : vector<1x8x6xbf16> to vector<8x6xbf16>
    %6 = vector.extract_strided_slice %1 {offsets = [2, 0, 0], sizes = [1, 8, 6], strides = [1, 1, 1]} : vector<5x8x6xbf16> to vector<1x8x6xbf16>
    %7 = vector.shape_cast %6 : vector<1x8x6xbf16> to vector<8x6xbf16>
    %8 = vector.extract_strided_slice %1 {offsets = [3, 0, 0], sizes = [1, 8, 6], strides = [1, 1, 1]} : vector<5x8x6xbf16> to vector<1x8x6xbf16>
    %9 = vector.shape_cast %8 : vector<1x8x6xbf16> to vector<8x6xbf16>
    %10 = vector.extract_strided_slice %1 {offsets = [4, 0, 0], sizes = [1, 8, 6], strides = [1, 1, 1]} : vector<5x8x6xbf16> to vector<1x8x6xbf16>
    %11 = vector.shape_cast %10 : vector<1x8x6xbf16> to vector<8x6xbf16>
    %c0_3 = arith.constant 0 : index
    %c0_4 = arith.constant 0 : index
    %c0_5 = arith.constant 0 : index
    %12 = vector.load %arg2[%c0_3, %c0_4, %c0_5] : memref<3x6x128xbf16, #tpu.memory_space<vmem>>, vector<1x6x128xbf16>
    %13 = vector.shape_cast %12 : vector<1x6x128xbf16> to vector<6x128xbf16>
    %c1 = arith.constant 1 : index
    %c0_6 = arith.constant 0 : index
    %c0_7 = arith.constant 0 : index
    %14 = vector.load %arg2[%c1, %c0_6, %c0_7] : memref<3x6x128xbf16, #tpu.memory_space<vmem>>, vector<1x6x128xbf16>
    %15 = vector.shape_cast %14 : vector<1x6x128xbf16> to vector<6x128xbf16>
    %c2 = arith.constant 2 : index
    %c0_8 = arith.constant 0 : index
    %c0_9 = arith.constant 0 : index
    %16 = vector.load %arg2[%c2, %c0_8, %c0_9] : memref<3x6x128xbf16, #tpu.memory_space<vmem>>, vector<1x6x128xbf16>
    %17 = vector.shape_cast %16 : vector<1x6x128xbf16> to vector<6x128xbf16>
    %c0_10 = arith.constant 0 : index
    %c0_11 = arith.constant 0 : index
    %18 = vector.load %arg3[%c0_10, %c0_11] : memref<1x128xf32, #tpu.memory_space<vmem>>, vector<1x128xf32>
    %cst = arith.constant dense<0.000000e+00> : vector<8x128xf32>
    %19 = tpu.matmul %3, %13, %cst {dimension_numbers = #tpu.dot_dimension_numbers<[1], [0], [0], [1], [0, 0, 1, 1], [], []>} : vector<8x6xbf16>, vector<6x128xbf16>, vector<8x128xf32> -> vector<8x128xf32>
    %cst_12 = arith.constant dense<0.000000e+00> : vector<8x128xf32>
    %20 = tpu.matmul %5, %15, %cst_12 {dimension_numbers = #tpu.dot_dimension_numbers<[1], [0], [0], [1], [0, 0, 1, 1], [], []>} : vector<8x6xbf16>, vector<6x128xbf16>, vector<8x128xf32> -> vector<8x128xf32>
    %21 = arith.addf %19, %20 : vector<8x128xf32>
    %cst_13 = arith.constant dense<0.000000e+00> : vector<8x128xf32>
    %22 = tpu.matmul %7, %17, %cst_13 {dimension_numbers = #tpu.dot_dimension_numbers<[1], [0], [0], [1], [0, 0, 1, 1], [], []>} : vector<8x6xbf16>, vector<6x128xbf16>, vector<8x128xf32> -> vector<8x128xf32>
    %23 = arith.addf %21, %22 : vector<8x128xf32>
    %24 = vector.broadcast %18 : vector<1x128xf32> to vector<8x128xf32>
    %25 = arith.addf %23, %24 : vector<8x128xf32>
    %cst_14 = arith.constant 0.000000e+00 : f32
    %26 = vector.broadcast %cst_14 : f32 to vector<8x128xf32>
    %27 = arith.cmpf oge, %25, %26 : vector<8x128xf32>
    %cst_15 = arith.constant 0.899999976 : f32
    %28 = vector.broadcast %cst_15 : f32 to vector<8x128xf32>
    %29 = arith.mulf %28, %25 : vector<8x128xf32>
    %30 = arith.select %27, %25, %29 : vector<8x128xi1>, vector<8x128xf32>
    %cst_16 = arith.constant dense<0.000000e+00> : vector<8x128xf32>
    %31 = tpu.matmul %7, %13, %cst_16 {dimension_numbers = #tpu.dot_dimension_numbers<[1], [0], [0], [1], [0, 0, 1, 1], [], []>} : vector<8x6xbf16>, vector<6x128xbf16>, vector<8x128xf32> -> vector<8x128xf32>
    %cst_17 = arith.constant dense<0.000000e+00> : vector<8x128xf32>
    %32 = tpu.matmul %9, %15, %cst_17 {dimension_numbers = #tpu.dot_dimension_numbers<[1], [0], [0], [1], [0, 0, 1, 1], [], []>} : vector<8x6xbf16>, vector<6x128xbf16>, vector<8x128xf32> -> vector<8x128xf32>
    %33 = arith.addf %31, %32 : vector<8x128xf32>
    %cst_18 = arith.constant dense<0.000000e+00> : vector<8x128xf32>
    %34 = tpu.matmul %11, %17, %cst_18 {dimension_numbers = #tpu.dot_dimension_numbers<[1], [0], [0], [1], [0, 0, 1, 1], [], []>} : vector<8x6xbf16>, vector<6x128xbf16>, vector<8x128xf32> -> vector<8x128xf32>
    %35 = arith.addf %33, %34 : vector<8x128xf32>
    %36 = vector.broadcast %18 : vector<1x128xf32> to vector<8x128xf32>
    %37 = arith.addf %35, %36 : vector<8x128xf32>
    %cst_19 = arith.constant 0.000000e+00 : f32
    %38 = vector.broadcast %cst_19 : f32 to vector<8x128xf32>
    %39 = arith.cmpf oge, %37, %38 : vector<8x128xf32>
    %cst_20 = arith.constant 0.899999976 : f32
    %40 = vector.broadcast %cst_20 : f32 to vector<8x128xf32>
    %41 = arith.mulf %40, %37 : vector<8x128xf32>
    %42 = arith.select %39, %37, %41 : vector<8x128xi1>, vector<8x128xf32>
    %c1_i32 = arith.constant 1 : i32
    %43 = tpu.dynamic_rotate %42 by %c1_i32 dim 0 : vector<8x128xf32>, i32 -> vector<8x128xf32>
    %44 = tpu.iota {dimensions = array<i32: 0>} : vector<8x128xi32>
    %c1_i32_21 = arith.constant 1 : i32
    %45 = vector.broadcast %c1_i32_21 : i32 to vector<8x128xi32>
    %46 = arith.cmpi sge, %44, %45 : vector<8x128xi32>
    %cst_22 = arith.constant 0.000000e+00 : f32
    %47 = vector.broadcast %cst_22 : f32 to vector<8x128xf32>
    %48 = arith.select %46, %43, %47 : vector<8x128xi1>, vector<8x128xf32>
    %49 = arith.truncf %48 : vector<8x128xf32> to vector<8x128xbf16>
    %c0_23 = arith.constant 0 : index
    %c0_24 = arith.constant 0 : index
    %c0_25 = arith.constant 0 : index
    %50 = vector.load %arg4[%c0_23, %c0_24, %c0_25] : memref<3x128x128xbf16, #tpu.memory_space<vmem>>, vector<1x128x128xbf16>
    %51 = vector.shape_cast %50 : vector<1x128x128xbf16> to vector<128x128xbf16>
    %cst_26 = arith.constant dense<0.000000e+00> : vector<8x128xf32>
    %52 = tpu.matmul %49, %51, %cst_26 {dimension_numbers = #tpu.dot_dimension_numbers<[1], [0], [0], [1], [0, 0, 1, 1], [], []>} : vector<8x128xbf16>, vector<128x128xbf16>, vector<8x128xf32> -> vector<8x128xf32>
    %53 = arith.truncf %30 : vector<8x128xf32> to vector<8x128xbf16>
    %c1_27 = arith.constant 1 : index
    %c0_28 = arith.constant 0 : index
    %c0_29 = arith.constant 0 : index
    %54 = vector.load %arg4[%c1_27, %c0_28, %c0_29] : memref<3x128x128xbf16, #tpu.memory_space<vmem>>, vector<1x128x128xbf16>
    %55 = vector.shape_cast %54 : vector<1x128x128xbf16> to vector<128x128xbf16>
    %cst_30 = arith.constant dense<0.000000e+00> : vector<8x128xf32>
    %56 = tpu.matmul %53, %55, %cst_30 {dimension_numbers = #tpu.dot_dimension_numbers<[1], [0], [0], [1], [0, 0, 1, 1], [], []>} : vector<8x128xbf16>, vector<128x128xbf16>, vector<8x128xf32> -> vector<8x128xf32>
    %57 = arith.addf %52, %56 : vector<8x128xf32>
    %58 = arith.truncf %42 : vector<8x128xf32> to vector<8x128xbf16>
    %c2_31 = arith.constant 2 : index
    %c0_32 = arith.constant 0 : index
    %c0_33 = arith.constant 0 : index
    %59 = vector.load %arg4[%c2_31, %c0_32, %c0_33] : memref<3x128x128xbf16, #tpu.memory_space<vmem>>, vector<1x128x128xbf16>
    %60 = vector.shape_cast %59 : vector<1x128x128xbf16> to vector<128x128xbf16>
    %cst_34 = arith.constant dense<0.000000e+00> : vector<8x128xf32>
    %61 = tpu.matmul %58, %60, %cst_34 {dimension_numbers = #tpu.dot_dimension_numbers<[1], [0], [0], [1], [0, 0, 1, 1], [], []>} : vector<8x128xbf16>, vector<128x128xbf16>, vector<8x128xf32> -> vector<8x128xf32>
    %62 = arith.addf %57, %61 : vector<8x128xf32>
    %c0_35 = arith.constant 0 : index
    %c0_36 = arith.constant 0 : index
    %63 = vector.load %arg5[%c0_35, %c0_36] : memref<1x128xf32, #tpu.memory_space<vmem>>, vector<1x128xf32>
    %64 = vector.broadcast %63 : vector<1x128xf32> to vector<8x128xf32>
    %65 = arith.addf %62, %64 : vector<8x128xf32>
    %cst_37 = arith.constant 0.000000e+00 : f32
    %66 = vector.broadcast %cst_37 : f32 to vector<8x128xf32>
    %67 = arith.cmpf oge, %65, %66 : vector<8x128xf32>
    %cst_38 = arith.constant 0.899999976 : f32
    %68 = vector.broadcast %cst_38 : f32 to vector<8x128xf32>
    %69 = arith.mulf %68, %65 : vector<8x128xf32>
    %70 = arith.select %67, %65, %69 : vector<8x128xi1>, vector<8x128xf32>
    %71 = arith.truncf %70 : vector<8x128xf32> to vector<8x128xbf16>
    %c0_39 = arith.constant 0 : index
    %c0_40 = arith.constant 0 : index
    %c0_41 = arith.constant 0 : index
    %72 = vector.load %arg6[%c0_39, %c0_40, %c0_41] : memref<1x8x128xbf16, #tpu.memory_space<vmem>>, vector<1x8x128xbf16>
    %73 = vector.shape_cast %72 : vector<1x8x128xbf16> to vector<8x128xbf16>
    %74 = vector.shape_cast %71 : vector<8x128xbf16> to vector<1x8x128xbf16>
    tpu.vector_store %arg6[%c0_39, %c0_40, %c0_41], %74 {strides = array<i32>} : memref<1x8x128xbf16, #tpu.memory_space<vmem>>, vector<1x8x128xbf16>,
    return
  }
  func.func @transform_0(%arg0: i32) -> (i32, i32, i32, i32) {
    %c0_i32 = arith.constant 0 : i32
    %c0_i32_0 = arith.constant 0 : i32
    %c0_i32_1 = arith.constant 0 : i32
    %c0_i32_2 = arith.constant 0 : i32
    return %arg0, %c0_i32, %c0_i32_0, %c0_i32_1 : i32, i32, i32, i32
  }
  func.func @transform_1(%arg0: i32) -> (i32, i32, i32) {
    %c0_i32 = arith.constant 0 : i32
    %c0_i32_0 = arith.constant 0 : i32
    %c0_i32_1 = arith.constant 0 : i32
    %c0_i32_2 = arith.constant 0 : i32
    return %c0_i32, %c0_i32_0, %c0_i32_1 : i32, i32, i32
  }
  func.func @transform_2(%arg0: i32) -> (i32, i32) {
    %c0_i32 = arith.constant 0 : i32
    %c0_i32_0 = arith.constant 0 : i32
    %c0_i32_1 = arith.constant 0 : i32
    return %c0_i32, %c0_i32_0 : i32, i32
  }
  func.func @transform_3(%arg0: i32) -> (i32, i32, i32) {
    %c0_i32 = arith.constant 0 : i32
    %c0_i32_0 = arith.constant 0 : i32
    %c0_i32_1 = arith.constant 0 : i32
    %c0_i32_2 = arith.constant 0 : i32
    return %c0_i32, %c0_i32_0, %c0_i32_1 : i32, i32, i32
  }
  func.func @transform_4(%arg0: i32) -> (i32, i32) {
    %c0_i32 = arith.constant 0 : i32
    %c0_i32_0 = arith.constant 0 : i32
    %c0_i32_1 = arith.constant 0 : i32
    return %c0_i32, %c0_i32_0 : i32, i32
  }
  func.func @transform_5(%arg0: i32) -> (i32, i32, i32) {
    %c0_i32 = arith.constant 0 : i32
    %c0_i32_0 = arith.constant 0 : i32
    %c0_i32_1 = arith.constant 0 : i32
    return %arg0, %c0_i32, %c0_i32_0 : i32, i32, i32
  }
}

module attributes {stable_mosaic.version = 11 : i64} {
  func.func @head_kernel(%arg0: i32, %arg1: i32, %arg2: memref<2x512xbf16, #tpu.memory_space<vmem>>, %arg3: memref<512x128xbf16, #tpu.memory_space<vmem>>, %arg4: memref<1x128xf32, #tpu.memory_space<vmem>>, %arg5: memref<128x128xbf16, #tpu.memory_space<vmem>>, %arg6: memref<1x128xf32, #tpu.memory_space<vmem>>, %arg7: memref<2x128xf32, #tpu.memory_space<vmem>>, %arg8: memref<2x128xf32, #tpu.memory_space<vmem>>) attributes {dimension_semantics = [#tpu.dimension_semantics<parallel>, #tpu.dimension_semantics<arbitrary>], iteration_bounds = array<i64: 1, 2>, scalar_prefetch = 0 : i64, scratch_operands = 1 : i64, tpu.core_type = #tpu.core_type<tc>, window_params = [{transform_indices = @transform_0, window_bounds = array<i64: 2, 512>}, {transform_indices = @transform_1, window_bounds = array<i64: 512, 128>}, {pipeline_mode = #tpu.pipeline_mode<synchronous>, transform_indices = @transform_2, window_bounds = array<i64: 1, 128>}, {pipeline_mode = #tpu.pipeline_mode<synchronous>, transform_indices = @transform_3, window_bounds = array<i64: 128, 128>}, {pipeline_mode = #tpu.pipeline_mode<synchronous>, transform_indices = @transform_4, window_bounds = array<i64: 1, 128>}, {transform_indices = @transform_5, window_bounds = array<i64: 2, 128>}]} {
    %c0_i32 = arith.constant 0 : i32
    %0 = arith.cmpi eq, %arg1, %c0_i32 : i32
    %1 = arith.extui %0 : i1 to i32
    %c0_i32_0 = arith.constant 0 : i32
    %2 = arith.cmpi ne, %1, %c0_i32_0 : i32
    scf.if %2 {
      %cst_9 = arith.constant 0.000000e+00 : f32
      %12 = vector.broadcast %cst_9 : f32 to vector<2x128xf32>
      %c0_10 = arith.constant 0 : index
      %c0_11 = arith.constant 0 : index
      %13 = vector.load %arg8[%c0_10, %c0_11] : memref<2x128xf32, #tpu.memory_space<vmem>>, vector<2x128xf32>
      tpu.vector_store %arg8[%c0_10, %c0_11], %12 {strides = array<i32>} : memref<2x128xf32, #tpu.memory_space<vmem>>, vector<2x128xf32>,
    } else {
    }
    %c0 = arith.constant 0 : index
    %c0_1 = arith.constant 0 : index
    %3 = vector.load %arg8[%c0, %c0_1] : memref<2x128xf32, #tpu.memory_space<vmem>>, vector<2x128xf32>
    %c0_2 = arith.constant 0 : index
    %c0_3 = arith.constant 0 : index
    %4 = vector.load %arg2[%c0_2, %c0_3] : memref<2x512xbf16, #tpu.memory_space<vmem>>, vector<2x512xbf16>
    %c0_4 = arith.constant 0 : index
    %c0_5 = arith.constant 0 : index
    %5 = vector.load %arg3[%c0_4, %c0_5] : memref<512x128xbf16, #tpu.memory_space<vmem>>, vector<512x128xbf16>
    %cst = arith.constant dense<0.000000e+00> : vector<2x128xf32>
    %6 = tpu.matmul %4, %5, %cst {dimension_numbers = #tpu.dot_dimension_numbers<[1], [0], [0], [1], [0, 0, 1, 1], [], []>} : vector<2x512xbf16>, vector<512x128xbf16>, vector<2x128xf32> -> vector<2x128xf32>
    %7 = arith.addf %3, %6 : vector<2x128xf32>
    %c0_6 = arith.constant 0 : index
    %c0_7 = arith.constant 0 : index
    %8 = vector.load %arg8[%c0_6, %c0_7] : memref<2x128xf32, #tpu.memory_space<vmem>>, vector<2x128xf32>
    tpu.vector_store %arg8[%c0_6, %c0_7], %7 {strides = array<i32>} : memref<2x128xf32, #tpu.memory_space<vmem>>, vector<2x128xf32>,
    %c1_i32 = arith.constant 1 : i32
    %9 = arith.cmpi eq, %arg1, %c1_i32 : i32
    %10 = arith.extui %9 : i1 to i32
    %c0_i32_8 = arith.constant 0 : i32
    %11 = arith.cmpi ne, %10, %c0_i32_8 : i32
    scf.if %11 {
      %c0_9 = arith.constant 0 : index
      %c0_10 = arith.constant 0 : index
      %12 = vector.load %arg8[%c0_9, %c0_10] : memref<2x128xf32, #tpu.memory_space<vmem>>, vector<2x128xf32>
      %c0_11 = arith.constant 0 : index
      %c0_12 = arith.constant 0 : index
      %13 = vector.load %arg4[%c0_11, %c0_12] : memref<1x128xf32, #tpu.memory_space<vmem>>, vector<1x128xf32>
      %14 = vector.broadcast %13 : vector<1x128xf32> to vector<2x128xf32>
      %15 = arith.addf %12, %14 : vector<2x128xf32>
      %cst_13 = arith.constant 0.000000e+00 : f32
      %16 = vector.broadcast %cst_13 : f32 to vector<2x128xf32>
      %17 = arith.cmpf oge, %15, %16 : vector<2x128xf32>
      %cst_14 = arith.constant 0.899999976 : f32
      %18 = vector.broadcast %cst_14 : f32 to vector<2x128xf32>
      %19 = arith.mulf %18, %15 : vector<2x128xf32>
      %20 = arith.select %17, %15, %19 : vector<2x128xi1>, vector<2x128xf32>
      %21 = arith.truncf %20 : vector<2x128xf32> to vector<2x128xbf16>
      %c0_15 = arith.constant 0 : index
      %c0_16 = arith.constant 0 : index
      %22 = vector.load %arg5[%c0_15, %c0_16] : memref<128x128xbf16, #tpu.memory_space<vmem>>, vector<128x128xbf16>
      %cst_17 = arith.constant dense<0.000000e+00> : vector<2x128xf32>
      %23 = tpu.matmul %21, %22, %cst_17 {dimension_numbers = #tpu.dot_dimension_numbers<[1], [0], [0], [1], [0, 0, 1, 1], [], []>} : vector<2x128xbf16>, vector<128x128xbf16>, vector<2x128xf32> -> vector<2x128xf32>
      %c0_18 = arith.constant 0 : index
      %c0_19 = arith.constant 0 : index
      %24 = vector.load %arg6[%c0_18, %c0_19] : memref<1x128xf32, #tpu.memory_space<vmem>>, vector<1x128xf32>
      %25 = vector.broadcast %24 : vector<1x128xf32> to vector<2x128xf32>
      %26 = arith.addf %23, %25 : vector<2x128xf32>
      %cst_20 = arith.constant 0.000000e+00 : f32
      %27 = vector.broadcast %cst_20 : f32 to vector<2x128xf32>
      %28 = arith.cmpf oge, %26, %27 : vector<2x128xf32>
      %cst_21 = arith.constant 0.899999976 : f32
      %29 = vector.broadcast %cst_21 : f32 to vector<2x128xf32>
      %30 = arith.mulf %29, %26 : vector<2x128xf32>
      %31 = arith.select %28, %26, %30 : vector<2x128xi1>, vector<2x128xf32>
      %32 = tpu.iota {dimensions = array<i32: 1>} : vector<2x128xi32>
      %c10_i32 = arith.constant 10 : i32
      %33 = vector.broadcast %c10_i32 : i32 to vector<2x128xi32>
      %34 = arith.cmpi slt, %32, %33 : vector<2x128xi32>
      %cst_22 = arith.constant -1.000000e+30 : f32
      %35 = vector.broadcast %cst_22 : f32 to vector<2x128xf32>
      %36 = arith.select %34, %31, %35 : vector<2x128xi1>, vector<2x128xf32>
      %cst_23 = arith.constant dense<0xFF800000> : vector<2xf32>
      %37 = vector.multi_reduction <maximumf>, %36, %cst_23 [1] : vector<2x128xf32> to vector<2xf32>
      %38 = vector.shape_cast %37 : vector<2xf32> to vector<2x1xf32>
      %39 = vector.broadcast %38 : vector<2x1xf32> to vector<2x128xf32>
      %40 = arith.subf %36, %39 : vector<2x128xf32>
      %41 = math.exp %40 : vector<2x128xf32>
      %cst_24 = arith.constant dense<0.000000e+00> : vector<2xf32>
      %42 = vector.multi_reduction <add>, %41, %cst_24 [1] : vector<2x128xf32> to vector<2xf32>
      %43 = vector.shape_cast %42 : vector<2xf32> to vector<2x1xf32>
      %44 = math.log %43 : vector<2x1xf32>
      %45 = arith.addf %38, %44 : vector<2x1xf32>
      %46 = vector.broadcast %45 : vector<2x1xf32> to vector<2x128xf32>
      %47 = arith.subf %36, %46 : vector<2x128xf32>
      %c0_25 = arith.constant 0 : index
      %c0_26 = arith.constant 0 : index
      %48 = vector.load %arg7[%c0_25, %c0_26] : memref<2x128xf32, #tpu.memory_space<vmem>>, vector<2x128xf32>
      tpu.vector_store %arg7[%c0_25, %c0_26], %47 {strides = array<i32>} : memref<2x128xf32, #tpu.memory_space<vmem>>, vector<2x128xf32>,
    } else {
    }
    return
  }
  func.func @transform_0(%arg0: i32, %arg1: i32) -> (i32, i32) {
    %c0_i32 = arith.constant 0 : i32
    return %arg0, %arg1 : i32, i32
  }
  func.func @transform_1(%arg0: i32, %arg1: i32) -> (i32, i32) {
    %c0_i32 = arith.constant 0 : i32
    %c0_i32_0 = arith.constant 0 : i32
    return %arg1, %c0_i32 : i32, i32
  }
  func.func @transform_2(%arg0: i32, %arg1: i32) -> (i32, i32) {
    %c0_i32 = arith.constant 0 : i32
    %c0_i32_0 = arith.constant 0 : i32
    %c0_i32_1 = arith.constant 0 : i32
    return %c0_i32, %c0_i32_0 : i32, i32
  }
  func.func @transform_3(%arg0: i32, %arg1: i32) -> (i32, i32) {
    %c0_i32 = arith.constant 0 : i32
    %c0_i32_0 = arith.constant 0 : i32
    %c0_i32_1 = arith.constant 0 : i32
    return %c0_i32, %c0_i32_0 : i32, i32
  }
  func.func @transform_4(%arg0: i32, %arg1: i32) -> (i32, i32) {
    %c0_i32 = arith.constant 0 : i32
    %c0_i32_0 = arith.constant 0 : i32
    %c0_i32_1 = arith.constant 0 : i32
    return %c0_i32, %c0_i32_0 : i32, i32
  }
  func.func @transform_5(%arg0: i32, %arg1: i32) -> (i32, i32) {
    %c0_i32 = arith.constant 0 : i32
    %c0_i32_0 = arith.constant 0 : i32
    return %arg0, %c0_i32 : i32, i32
  }
}

</mosaic_0001>

<llo_original>
// kernel: cnn_forward.2
$region0: #{cnn_forward.2}
  #allocation0 [shape = 'u32[]', space=smem, size = 0x4, offset = 0x4, fixed_abs, tag = 'smem constant byte address 0x4 - core index']
  #allocation1 [shape = 'u32[144,128]{1,0:T(1,128)}', space=vmem, size = 0x12000, scoped, tag = 'internal scratch']
  %s0 = inlined_call_operand.vmem [shape: bf16[2,5,8,6], index: 0, kind: input, shape index: {}]
  %s1 = inlined_call_operand.vmem [shape: bf16[3,6,128], index: 1, kind: input, shape index: {}]
  %s2 = inlined_call_operand.vmem [shape: f32[1,128], index: 2, kind: input, shape index: {}]
  %s3 = inlined_call_operand.vmem [shape: bf16[3,128,128], index: 3, kind: input, shape index: {}]
  %s4 = inlined_call_operand.vmem [shape: f32[1,128], index: 4, kind: input, shape index: {}]
  %s5 = inlined_call_operand.vmem [shape: bf16[2,8,128], index: 5, kind: output, shape index: {}]
  %s6 = sld [smem:[#allocation0]]
  $region53: #{cnn_forward.2} parent=0
    _
  %s8 = ssub.s32 1, %s6
  %s9 = scalar_select 0, %s8, %s6
  loop: start=0, step=1, limit=4
  $region2: #{cnn_forward.2} parent=0 // loop_pre_header
    _
  $region3: #{cnn_forward.2} parent=0 // loop_header
    %s11 = sphi 0, %s15
    %p12 = scmp.ge.s32.totalorder %s11, 4
    %s21 = sphi 0, %s23
    %s24 = sphi 0, %s21
    %s25 = sphi 0, %s24
    %s41 = sphi 0, %s25
    %s45 = sphi 0, %s45
    %s47 = sphi 0, %s45
    %s48 = sphi 0, %s47
    %s62 = sphi 0, %s48
    %s66 = sphi 0, %s66
    %s68 = sphi 0, %s66
    %s69 = sphi 0, %s68
    %s83 = sphi 0, %s69
    %s87 = sphi 0, %s87
    %s89 = sphi 0, %s87
    %s90 = sphi 0, %s89
    %s104 = sphi 0, %s90
    %s108 = sphi 0, %s108
    %s110 = sphi 0, %s108
    %s111 = sphi 0, %s110
    %s125 = sphi 0, %s111
    %s131 = sphi 0, %s133
    %s134 = sphi 0, %s131
    %s135 = sphi 0, %s134
    %s151 = sphi 0, %s135
  $region4: #{cnn_forward.2} parent=0 // loop_header_branch
    %14 = sbr.rel (%p12) target = $region8
  $region5: #{cnn_forward.2} parent=0 // loop_body
    %s16 = ssub.s32 %s11, 1
    %s17 = ssub.s32 %s11, 2
    %s18 = sadd.s32 %s11, 1
    %s19 = ssub.s32 %s11, %s18
    %p20 = scmp.eq.s32.totalorder %s19, 0
    %s22 = sadd.s32 %s21, 1
    %s23 = scalar_select %p20, %s21, %s22
    %p26 = pneg %p20
    %p27 = scmp.eq.s32.totalorder %s11, 1
    %p28 = por %p26, %p27
    %p29 = scmp.ne.s32.totalorder %s21, %s24
    %p30 = scmp.eq.s32.totalorder %s11, 0
    %p31 = por %p29, %p30
    %p32 = scmp.ne.s32.totalorder %s21, %s24
    %p33 = scmp.eq.s32.totalorder %s16, 1
    %p34 = por %p32, %p33
    %p35 = scmp.ne.s32.totalorder %s24, %s25
    %p36 = scmp.eq.s32.totalorder %s16, 0
    %p37 = por %p35, %p36
    %p38 = scmp.ne.s32.totalorder %s24, %s25
    %p39 = scmp.eq.s32.totalorder %s17, 1
    %p40 = por %p38, %p39
    %p42 = scmp.ne.s32.totalorder %s25, %s41
    %p43 = scmp.eq.s32.totalorder %s17, 0
    %p44 = por %p42, %p43
    %s46 = sadd.s32 %s45, 1
    %p49 = scmp.eq.s32.totalorder %s11, 1
    %p50 = scmp.ne.s32.totalorder %s45, %s47
    %p51 = scmp.eq.s32.totalorder %s11, 0
    %p52 = por %p50, %p51
    %p53 = scmp.ne.s32.totalorder %s45, %s47
    %p54 = scmp.eq.s32.totalorder %s16, 1
    %p55 = por %p53, %p54
    %p56 = scmp.ne.s32.totalorder %s47, %s48
    %p57 = scmp.eq.s32.totalorder %s16, 0
    %p58 = por %p56, %p57
    %p59 = scmp.ne.s32.totalorder %s47, %s48
    %p60 = scmp.eq.s32.totalorder %s17, 1
    %p61 = por %p59, %p60
    %p63 = scmp.ne.s32.totalorder %s48, %s62
    %p64 = scmp.eq.s32.totalorder %s17, 0
    %p65 = por %p63, %p64
    %s67 = sadd.s32 %s66, 1
    %p70 = scmp.eq.s32.totalorder %s11, 1
    %p71 = scmp.ne.s32.totalorder %s66, %s68
    %p72 = scmp.eq.s32.totalorder %s11, 0
    %p73 = por %p71, %p72
    %p74 = scmp.ne.s32.totalorder %s66, %s68
    %p75 = scmp.eq.s32.totalorder %s16, 1
    %p76 = por %p74, %p75
    %p77 = scmp.ne.s32.totalorder %s68, %s69
    %p78 = scmp.eq.s32.totalorder %s16, 0
    %p79 = por %p77, %p78
    %p80 = scmp.ne.s32.totalorder %s68, %s69
    %p81 = scmp.eq.s32.totalorder %s17, 1
    %p82 = por %p80, %p81
    %p84 = scmp.ne.s32.totalorder %s69, %s83
    %p85 = scmp.eq.s32.totalorder %s17, 0
    %p86 = por %p84, %p85
    %s88 = sadd.s32 %s87, 1
    %p91 = scmp.eq.s32.totalorder %s11, 1
    %p92 = scmp.ne.s32.totalorder %s87, %s89
    %p93 = scmp.eq.s32.totalorder %s11, 0
    %p94 = por %p92, %p93
    %p95 = scmp.ne.s32.totalorder %s87, %s89
    %p96 = scmp.eq.s32.totalorder %s16, 1
    %p97 = por %p95, %p96
    %p98 = scmp.ne.s32.totalorder %s89, %s90
    %p99 = scmp.eq.s32.totalorder %s16, 0
    %p100 = por %p98, %p99
    %p101 = scmp.ne.s32.totalorder %s89, %s90
    %p102 = scmp.eq.s32.totalorder %s17, 1
    %p103 = por %p101, %p102
    %p105 = scmp.ne.s32.totalorder %s90, %s104
    %p106 = scmp.eq.s32.totalorder %s17, 0
    %p107 = por %p105, %p106
    %s109 = sadd.s32 %s108, 1
    %p112 = scmp.eq.s32.totalorder %s11, 1
    %p113 = scmp.ne.s32.totalorder %s108, %s110
    %p114 = scmp.eq.s32.totalorder %s11, 0
    %p115 = por %p113, %p114
    %p116 = scmp.ne.s32.totalorder %s108, %s110
    %p117 = scmp.eq.s32.totalorder %s16, 1
    %p118 = por %p116, %p117
    %p119 = scmp.ne.s32.totalorder %s110, %s111
    %p120 = scmp.eq.s32.totalorder %s16, 0
    %p121 = por %p119, %p120
    %p122 = scmp.ne.s32.totalorder %s110, %s111
    %p123 = scmp.eq.s32.totalorder %s17, 1
    %p124 = por %p122, %p123
    %p126 = scmp.ne.s32.totalorder %s111, %s125
    %p127 = scmp.eq.s32.totalorder %s17, 0
    %p128 = por %p126, %p127
    %s129 = ssub.s32 %s11, %s18
    %p130 = scmp.eq.s32.totalorder %s129, 0
    %s132 = sadd.s32 %s131, 1
    %s133 = scalar_select %p130, %s131, %s132
    %p136 = pneg %p130
    %p137 = scmp.eq.s32.totalorder %s11, 1
    %p138 = por %p136, %p137
    %p139 = scmp.ne.s32.totalorder %s131, %s134
    %p140 = scmp.eq.s32.totalorder %s11, 0
    %p141 = por %p139, %p140
    %p142 = scmp.ne.s32.totalorder %s131, %s134
    %p143 = scmp.eq.s32.totalorder %s16, 1
    %p144 = por %p142, %p143
    %p145 = scmp.ne.s32.totalorder %s134, %s135
    %p146 = scmp.eq.s32.totalorder %s16, 0
    %p147 = por %p145, %p146
    %p148 = scmp.ne.s32.totalorder %s134, %s135
    %p149 = scmp.eq.s32.totalorder %s17, 1
    %p150 = por %p148, %p149
    %p152 = scmp.ne.s32.totalorder %s135, %s151
    %p153 = scmp.eq.s32.totalorder %s17, 0
    %p154 = por %p152, %p153
    %p155 = scmp.le.s32.totalorder 1, %s11
    %p156 = scmp.lt.s32.totalorder %s11, 3
    %p157 = pnand %p155, %p156
    %p158 = pneg %p157
    // Predicated region
    $region9: #{cnn_forward.2} parent=5 // pred_check
      _
    $region10: #{cnn_forward.2} parent=5 // pred_check_branch
      %160 = sbr.rel (%p157) target = $region12
    $region11: #{cnn_forward.2} parent=5 // pred_region
      %s161 = ssub.s32 %s11, 1
      // Predicated region
      $region13: #{cnn_forward.2} parent=11 // pred_check
        %p162 = pneg %p58
      $region14: #{cnn_forward.2} parent=11 // pred_check_branch
        %164 = sbr.rel (%p162) target = $region16
      $region15: #{cnn_forward.2} parent=11 // pred_region
        _
      $region16: #{cnn_forward.2} parent=11 // pred_fallthru
        _
      // Predicated region
      $region17: #{cnn_forward.2} parent=11 // pred_check
        %p165 = pneg %p79
      $region18: #{cnn_forward.2} parent=11 // pred_check_branch
        %167 = sbr.rel (%p165) target = $region20
      $region19: #{cnn_forward.2} parent=11 // pred_region
        _
      $region20: #{cnn_forward.2} parent=11 // pred_fallthru
        _
      // Predicated region
      $region21: #{cnn_forward.2} parent=11 // pred_check
        %p168 = pneg %p100
      $region22: #{cnn_forward.2} parent=11 // pred_check_branch
        %170 = sbr.rel (%p168) target = $region24
      $region23: #{cnn_forward.2} parent=11 // pred_region
        _
      $region24: #{cnn_forward.2} parent=11 // pred_fallthru
        _
      // Predicated region
      $region25: #{cnn_forward.2} parent=11 // pred_check
        %p171 = pneg %p121
      $region26: #{cnn_forward.2} parent=11 // pred_check_branch
        %173 = sbr.rel (%p171) target = $region28
      $region27: #{cnn_forward.2} parent=11 // pred_region
        _
      $region28: #{cnn_forward.2} parent=11 // pred_fallthru
        _
    $region12: #{cnn_forward.2} parent=5 // pred_fallthru
      _
    %p174 = scmp.lt.s32.totalorder %s11, 2
    // Predicated region
    $region29: #{cnn_forward.2} parent=5 // pred_check
      %p175 = pneg %p174
    $region30: #{cnn_forward.2} parent=5 // pred_check_branch
      %177 = sbr.rel (%p175) target = $region32
    $region31: #{cnn_forward.2} parent=5 // pred_region
      // Predicated region
      $region33: #{cnn_forward.2} parent=31 // pred_check
        %p178 = pneg %p31
      $region34: #{cnn_forward.2} parent=31 // pred_check_branch
        %180 = sbr.rel (%p178) target = $region36
      $region35: #{cnn_forward.2} parent=31 // pred_region
        %p181 = scmp.lt.s32.totalorder %s11, 1
        %s182 = scalar_select %p181, %s11, 1
        %s183 = smul.addr %s182, 5
        %s184 = smul.addr %s183, 4
        %s185 = scalar_lea.vmem %s0, %s184
      $region36: #{cnn_forward.2} parent=31 // pred_fallthru
        _
    $region32: #{cnn_forward.2} parent=5 // pred_fallthru
      _
    %p186 = scmp.le.s32.totalorder 1, %s11
    %p187 = scmp.lt.s32.totalorder %s11, 3
    %p188 = pnand %p186, %p187
    %p189 = pneg %p188
    // Predicated region
    $region37: #{cnn_forward.2} parent=5 // pred_check
      _
    $region38: #{cnn_forward.2} parent=5 // pred_check_branch
      %191 = sbr.rel (%p188) target = $region40
    $region39: #{cnn_forward.2} parent=5 // pred_region
      %s192 = ssub.s32 %s11, 1
      %p193 = scmp.lt.s32.totalorder %s16, 1
      %s194 = scalar_select %p193, %s16, 1
      %s195 = smul.addr %s194, 5
      %s196 = smul.addr %s195, 4
      %s197 = scalar_lea.vmem %s0, %s196
      %p198 = pneg %p37
      %p199 = pneg %p34
      %p200 = pneg %p58
      %p201 = pneg %p55
      %p202 = pneg %p79
      %p203 = pneg %p76
      %p204 = pneg %p100
      %p205 = pneg %p97
      %p206 = pneg %p121
      %p207 = pneg %p118
      %p208 = pneg %p147
      %p209 = pneg %p144
      %p210 = scmp.lt.s32.totalorder %s16, 1
      %s211 = scalar_select %p210, %s16, 1
      %s212 = smul.addr %s211, 4
      %s213 = scalar_lea.vmem %s5, %s212
      %p214 = scmp.lt.s32.totalorder %s16, 1
      %s215 = scalar_select %p214, %s16, 1
      %s216 = smul.addr %s215, 5
      %s217 = smul.addr %s216, 4
      %s218 = scalar_lea.vmem %s0, %s217
      %p219 = scmp.lt.s32.totalorder %s16, 1
      %s220 = scalar_select %p219, %s16, 1
      %s221 = smul.addr %s220, 4
      %s222 = scalar_lea.vmem %s5, %s221
      %v224 = vld [vmem:[%s218] sm:$0xf]
      %v225 = vld [vmem:[%s218 + $0x4] sm:$0xf]
      %v226 = vld [vmem:[%s218 + $0x8] sm:$0xf]
      %v227 = vld [vmem:[%s218 + $0xc] sm:$0xf]
      %v228 = vld [vmem:[%s218 + $0x10] sm:$0xf]
      %v229 = vld [vmem:[%s1] sm:$0x7]
      %s230 = scalar_lea.vmem %s1, 4
      %v231 = vld [vmem:[%s230] sm:$0x7]
      %s232 = scalar_lea.vmem %s1, 8
      %v233 = vld [vmem:[%s232] sm:$0x7]
      %v234 = vld [vmem:[%s2] sm:$0x1]
      %vm235 = vcmask 48128
      %v237 = vsel %vm235, %v225, 0
      %vm239 = vcmask 1042432
      %v241 = vsel %vm239, %v231, 0
      %243 = vmatprep.subr.bf16.mxu0 0
      %244 = vmatpush1.bf16.msra.mxu0 %v241
      %245 = vmatprep.subr.bf16.mxu0 0
      %246 = vmatpush1.bf16.msra.mxu0 0
      %247 = vmatprep.subr.bf16.mxu0 0
      %248 = vmatpush1.bf16.msra.mxu0 0
      %249 = vmatprep.subr.bf16.mxu0 0
      %250 = vmatpush1.bf16.msra.mxu0 0
      %251 = vmatprep.subr.bf16.mxu0 0
      %252 = vmatpush1.bf16.msra.mxu0 0
      %253 = vmatprep.subr.bf16.mxu0 0
      %254 = vmatpush1.bf16.msra.mxu0 0
      %255 = vmatprep.subr.bf16.mxu0 0
      %256 = vmatpush1.bf16.msra.mxu0 0
      %257 = vmatprep.subr.bf16.mxu0 0
      %258 = vmatpush1.bf16.msra.mxu0 0
      %259 = vmatprep.subr.bf16.mxu0 0
      %260 = vmatpush1.bf16.msra.mxu0 0
      %261 = vmatprep.subr.bf16.mxu0 0
      %262 = vmatpush1.bf16.msra.mxu0 0
      %263 = vmatprep.subr.bf16.mxu0 0
      %264 = vmatpush1.bf16.msra.mxu0 0
      %265 = vmatprep.subr.bf16.mxu0 0
      %266 = vmatpush1.bf16.msra.mxu0 0
      %267 = vmatprep.subr.bf16.mxu0 0
      %268 = vmatpush1.bf16.msra.mxu0 0
      %269 = vmatprep.subr.bf16.mxu0 0
      %270 = vmatpush1.bf16.msra.mxu0 0
      %271 = vmatprep.subr.bf16.mxu0 0
      %272 = vmatpush1.bf16.msra.mxu0 0
      %273 = vmatprep.subr.bf16.mxu0 0
      %274 = vmatpush1.bf16.msra.mxu0 0
      %275 = vmatprep.mubr.bf16.mxu0 0
      %276 = vmatmul.mubr.bf16.gmra.mrb[0].mxu0 %v237
      %v277 = vpop.f32.mrb[0].mxu0
      %v278 = vadd.f32 0.0, %v277
      %v279 = vpop.f32.mrb[0].mxu0
      %v280 = vpop.f32.mrb[0].mxu0
      %v281 = vpop.f32.mrb[0].mxu0
      %282 = vdwg.mxu0
      %v284 = vsel %vm235, %v224, 0
      %v287 = vsel %vm239, %v229, 0
      %289 = vmatprep.subr.bf16.mxu0 0
      %290 = vmatpush1.bf16.msra.mxu0 %v287
      %291 = vmatprep.subr.bf16.mxu0 0
      %292 = vmatpush1.bf16.msra.mxu0 0
      %293 = vmatprep.subr.bf16.mxu0 0
      %294 = vmatpush1.bf16.msra.mxu0 0
      %295 = vmatprep.subr.bf16.mxu0 0
      %296 = vmatpush1.bf16.msra.mxu0 0
      %297 = vmatprep.subr.bf16.mxu0 0
      %298 = vmatpush1.bf16.msra.mxu0 0
      %299 = vmatprep.subr.bf16.mxu0 0
      %300 = vmatpush1.bf16.msra.mxu0 0
      %301 = vmatprep.subr.bf16.mxu0 0
      %302 = vmatpush1.bf16.msra.mxu0 0
      %303 = vmatprep.subr.bf16.mxu0 0
      %304 = vmatpush1.bf16.msra.mxu0 0
      %305 = vmatprep.subr.bf16.mxu0 0
      %306 = vmatpush1.bf16.msra.mxu0 0
      %307 = vmatprep.subr.bf16.mxu0 0
      %308 = vmatpush1.bf16.msra.mxu0 0
      %309 = vmatprep.subr.bf16.mxu0 0
      %310 = vmatpush1.bf16.msra.mxu0 0
      %311 = vmatprep.subr.bf16.mxu0 0
      %312 = vmatpush1.bf16.msra.mxu0 0
      %313 = vmatprep.subr.bf16.mxu0 0
      %314 = vmatpush1.bf16.msra.mxu0 0
      %315 = vmatprep.subr.bf16.mxu0 0
      %316 = vmatpush1.bf16.msra.mxu0 0
      %317 = vmatprep.subr.bf16.mxu0 0
      %318 = vmatpush1.bf16.msra.mxu0 0
      %319 = vmatprep.subr.bf16.mxu0 0
      %320 = vmatpush1.bf16.msra.mxu0 0
      %321 = vmatprep.mubr.bf16.mxu0 0
      %322 = vmatmul.mubr.bf16.gmra.mrb[0].mxu0 %v284
      %v323 = vpop.f32.mrb[0].mxu0
      %v324 = vadd.f32 %v278, %v323
      %v325 = vpop.f32.mrb[0].mxu0
      %v326 = vpop.f32.mrb[0].mxu0
      %v327 = vpop.f32.mrb[0].mxu0
      %328 = vdwg.mxu0
      %v330 = vsel %vm235, %v226, 0
      %v333 = vsel %vm239, %v233, 0
      %335 = vmatprep.subr.bf16.mxu0 0
      %336 = vmatpush1.bf16.msra.mxu0 %v333
      %337 = vmatprep.subr.bf16.mxu0 0
      %338 = vmatpush1.bf16.msra.mxu0 0
      %339 = vmatprep.subr.bf16.mxu0 0
      %340 = vmatpush1.bf16.msra.mxu0 0
      %341 = vmatprep.subr.bf16.mxu0 0
      %342 = vmatpush1.bf16.msra.mxu0 0
      %343 = vmatprep.subr.bf16.mxu0 0
      %344 = vmatpush1.bf16.msra.mxu0 0
      %345 = vmatprep.subr.bf16.mxu0 0
      %346 = vmatpush1.bf16.msra.mxu0 0
      %347 = vmatprep.subr.bf16.mxu0 0
      %348 = vmatpush1.bf16.msra.mxu0 0
      %349 = vmatprep.subr.bf16.mxu0 0
      %350 = vmatpush1.bf16.msra.mxu0 0
      %351 = vmatprep.subr.bf16.mxu0 0
      %352 = vmatpush1.bf16.msra.mxu0 0
      %353 = vmatprep.subr.bf16.mxu0 0
      %354 = vmatpush1.bf16.msra.mxu0 0
      %355 = vmatprep.subr.bf16.mxu0 0
      %356 = vmatpush1.bf16.msra.mxu0 0
      %357 = vmatprep.subr.bf16.mxu0 0
      %358 = vmatpush1.bf16.msra.mxu0 0
      %359 = vmatprep.subr.bf16.mxu0 0
      %360 = vmatpush1.bf16.msra.mxu0 0
      %361 = vmatprep.subr.bf16.mxu0 0
      %362 = vmatpush1.bf16.msra.mxu0 0
      %363 = vmatprep.subr.bf16.mxu0 0
      %364 = vmatpush1.bf16.msra.mxu0 0
      %365 = vmatprep.subr.bf16.mxu0 0
      %366 = vmatpush1.bf16.msra.mxu0 0
      %367 = vmatprep.mubr.bf16.mxu0 0
      %368 = vmatmul.mubr.bf16.gmra.mrb[0].mxu0 %v330
      %v369 = vpop.f32.mrb[0].mxu0
      %v370 = vadd.f32 0.0, %v369
      %v371 = vpop.f32.mrb[0].mxu0
      %v372 = vpop.f32.mrb[0].mxu0
      %v373 = vpop.f32.mrb[0].mxu0
      %374 = vdwg.mxu0
      %v375 = vadd.f32 %v324, %v370
      %v377 = vlaneseq
      %v378 = vshrl.u32 %v377, 7
      %v379 = vsub.s32 0, %v378
      %v380 = vrot.slane %v234, %v379
      %v382 = vadd.f32 %v375, %v380
      %vm383 = vcmp.ge.f32.partialorder %v382, 0.0
      %v384 = vmul.f32 %v382, 0.9
      %v385 = vsel %vm383, %v382, %v384
      %v387 = vsel %vm235, %v227, 0
      %389 = vmatprep.subr.bf16.mxu0 0
      %390 = vmatpush1.bf16.msra.mxu0 %v241
      %391 = vmatprep.subr.bf16.mxu0 0
      %392 = vmatpush1.bf16.msra.mxu0 0
      %393 = vmatprep.subr.bf16.mxu0 0
      %394 = vmatpush1.bf16.msra.mxu0 0
      %395 = vmatprep.subr.bf16.mxu0 0
      %396 = vmatpush1.bf16.msra.mxu0 0
      %397 = vmatprep.subr.bf16.mxu0 0
      %398 = vmatpush1.bf16.msra.mxu0 0
      %399 = vmatprep.subr.bf16.mxu0 0
      %400 = vmatpush1.bf16.msra.mxu0 0
      %401 = vmatprep.subr.bf16.mxu0 0
      %402 = vmatpush1.bf16.msra.mxu0 0
      %403 = vmatprep.subr.bf16.mxu0 0
      %404 = vmatpush1.bf16.msra.mxu0 0
      %405 = vmatprep.subr.bf16.mxu0 0
      %406 = vmatpush1.bf16.msra.mxu0 0
      %407 = vmatprep.subr.bf16.mxu0 0
      %408 = vmatpush1.bf16.msra.mxu0 0
      %409 = vmatprep.subr.bf16.mxu0 0
      %410 = vmatpush1.bf16.msra.mxu0 0
      %411 = vmatprep.subr.bf16.mxu0 0
      %412 = vmatpush1.bf16.msra.mxu0 0
      %413 = vmatprep.subr.bf16.mxu0 0
      %414 = vmatpush1.bf16.msra.mxu0 0
      %415 = vmatprep.subr.bf16.mxu0 0
      %416 = vmatpush1.bf16.msra.mxu0 0
      %417 = vmatprep.subr.bf16.mxu0 0
      %418 = vmatpush1.bf16.msra.mxu0 0
      %419 = vmatprep.subr.bf16.mxu0 0
      %420 = vmatpush1.bf16.msra.mxu0 0
      %421 = vmatprep.mubr.bf16.mxu0 0
      %422 = vmatmul.mubr.bf16.gmra.mrb[0].mxu0 %v387
      %v423 = vpop.f32.mrb[0].mxu0
      %v424 = vadd.f32 0.0, %v423
      %v425 = vpop.f32.mrb[0].mxu0
      %v426 = vpop.f32.mrb[0].mxu0
      %v427 = vpop.f32.mrb[0].mxu0
      %428 = vdwg.mxu0
      %429 = vmatprep.subr.bf16.mxu0 0
      %430 = vmatpush1.bf16.msra.mxu0 %v287
      %431 = vmatprep.subr.bf16.mxu0 0
      %432 = vmatpush1.bf16.msra.mxu0 0
      %433 = vmatprep.subr.bf16.mxu0 0
      %434 = vmatpush1.bf16.msra.mxu0 0
      %435 = vmatprep.subr.bf16.mxu0 0
      %436 = vmatpush1.bf16.msra.mxu0 0
      %437 = vmatprep.subr.bf16.mxu0 0
      %438 = vmatpush1.bf16.msra.mxu0 0
      %439 = vmatprep.subr.bf16.mxu0 0
      %440 = vmatpush1.bf16.msra.mxu0 0
      %441 = vmatprep.subr.bf16.mxu0 0
      %442 = vmatpush1.bf16.msra.mxu0 0
      %443 = vmatprep.subr.bf16.mxu0 0
      %444 = vmatpush1.bf16.msra.mxu0 0
      %445 = vmatprep.subr.bf16.mxu0 0
      %446 = vmatpush1.bf16.msra.mxu0 0
      %447 = vmatprep.subr.bf16.mxu0 0
      %448 = vmatpush1.bf16.msra.mxu0 0
      %449 = vmatprep.subr.bf16.mxu0 0
      %450 = vmatpush1.bf16.msra.mxu0 0
      %451 = vmatprep.subr.bf16.mxu0 0
      %452 = vmatpush1.bf16.msra.mxu0 0
      %453 = vmatprep.subr.bf16.mxu0 0
      %454 = vmatpush1.bf16.msra.mxu0 0
      %455 = vmatprep.subr.bf16.mxu0 0
      %456 = vmatpush1.bf16.msra.mxu0 0
      %457 = vmatprep.subr.bf16.mxu0 0
      %458 = vmatpush1.bf16.msra.mxu0 0
      %459 = vmatprep.subr.bf16.mxu0 0
      %460 = vmatpush1.bf16.msra.mxu0 0
      %461 = vmatprep.mubr.bf16.mxu0 0
      %462 = vmatmul.mubr.bf16.gmra.mrb[0].mxu0 %v330
      %v463 = vpop.f32.mrb[0].mxu0
      %v464 = vadd.f32 %v424, %v463
      %v465 = vpop.f32.mrb[0].mxu0
      %v466 = vpop.f32.mrb[0].mxu0
      %v467 = vpop.f32.mrb[0].mxu0
      %468 = vdwg.mxu0
      %v470 = vsel %vm235, %v228, 0
      %472 = vmatprep.subr.bf16.mxu0 0
      %473 = vmatpush1.bf16.msra.mxu0 %v333
      %474 = vmatprep.subr.bf16.mxu0 0
      %475 = vmatpush1.bf16.msra.mxu0 0
      %476 = vmatprep.subr.bf16.mxu0 0
      %477 = vmatpush1.bf16.msra.mxu0 0
      %478 = vmatprep.subr.bf16.mxu0 0
      %479 = vmatpush1.bf16.msra.mxu0 0
      %480 = vmatprep.subr.bf16.mxu0 0
      %481 = vmatpush1.bf16.msra.mxu0 0
      %482 = vmatprep.subr.bf16.mxu0 0
      %483 = vmatpush1.bf16.msra.mxu0 0
      %484 = vmatprep.subr.bf16.mxu0 0
      %485 = vmatpush1.bf16.msra.mxu0 0
      %486 = vmatprep.subr.bf16.mxu0 0
      %487 = vmatpush1.bf16.msra.mxu0 0
      %488 = vmatprep.subr.bf16.mxu0 0
      %489 = vmatpush1.bf16.msra.mxu0 0
      %490 = vmatprep.subr.bf16.mxu0 0
      %491 = vmatpush1.bf16.msra.mxu0 0
      %492 = vmatprep.subr.bf16.mxu0 0
      %493 = vmatpush1.bf16.msra.mxu0 0
      %494 = vmatprep.subr.bf16.mxu0 0
      %495 = vmatpush1.bf16.msra.mxu0 0
      %496 = vmatprep.subr.bf16.mxu0 0
      %497 = vmatpush1.bf16.msra.mxu0 0
      %498 = vmatprep.subr.bf16.mxu0 0
      %499 = vmatpush1.bf16.msra.mxu0 0
      %500 = vmatprep.subr.bf16.mxu0 0
      %501 = vmatpush1.bf16.msra.mxu0 0
      %502 = vmatprep.subr.bf16.mxu0 0
      %503 = vmatpush1.bf16.msra.mxu0 0
      %504 = vmatprep.mubr.bf16.mxu0 0
      %505 = vmatmul.mubr.bf16.gmra.mrb[0].mxu0 %v470
      %v506 = vpop.f32.mrb[0].mxu0
      %v507 = vadd.f32 0.0, %v506
      %v508 = vpop.f32.mrb[0].mxu0
      %v509 = vpop.f32.mrb[0].mxu0
      %v510 = vpop.f32.mrb[0].mxu0
      %511 = vdwg.mxu0
      %v512 = vadd.f32 %v464, %v507
      %v513 = vadd.f32 %v512, %v380
      %vm514 = vcmp.ge.f32.partialorder %v513, 0.0
      %v515 = vmul.f32 %v513, 0.9
      %v516 = vsel %vm514, %v513, %v515
      %v517 = vrot.slane %v516, 7
      %v518 = vlaneseq
      %v519 = vshrl.u32 %v518, 7
      %vm520 = vcmp.ge.s32.totalorder %v519, 1
      %v521 = vsel %vm520, %v517, 0.0
      %v522 = vpack.c.bf16 %v521, %v521
      %v523 = vld [vmem:[%s3] sm:$0xf]
      %v524 = vld [vmem:[%s3 + $0x4] sm:$0xf]
      %v525 = vld [vmem:[%s3 + $0x8] sm:$0xf]
      %v526 = vld [vmem:[%s3 + $0xc] sm:$0xf]
      %v527 = vld [vmem:[%s3 + $0x10] sm:$0xf]
      %v528 = vld [vmem:[%s3 + $0x14] sm:$0xf]
      %v529 = vld [vmem:[%s3 + $0x18] sm:$0xf]
      %v530 = vld [vmem:[%s3 + $0x1c] sm:$0xf]
      %v531 = vld [vmem:[%s3 + $0x20] sm:$0xf]
      %v532 = vld [vmem:[%s3 + $0x24] sm:$0xf]
      %v533 = vld [vmem:[%s3 + $0x28] sm:$0xf]
      %v534 = vld [vmem:[%s3 + $0x2c] sm:$0xf]
      %v535 = vld [vmem:[%s3 + $0x30] sm:$0xf]
      %v536 = vld [vmem:[%s3 + $0x34] sm:$0xf]
      %v537 = vld [vmem:[%s3 + $0x38] sm:$0xf]
      %v538 = vld [vmem:[%s3 + $0x3c] sm:$0xf]
      %v539 = vpack.c.bf16 %v385, %v385
      %s540 = scalar_lea.vmem %s3, 64
      %v541 = vld [vmem:[%s540] sm:$0xf]
      %v542 = vld [vmem:[%s540 + $0x4] sm:$0xf]
      %v543 = vld [vmem:[%s540 + $0x8] sm:$0xf]
      %v544 = vld [vmem:[%s540 + $0xc] sm:$0xf]
      %v545 = vld [vmem:[%s540 + $0x10] sm:$0xf]
      %v546 = vld [vmem:[%s540 + $0x14] sm:$0xf]
      %v547 = vld [vmem:[%s540 + $0x18] sm:$0xf]
      %v548 = vld [vmem:[%s540 + $0x1c] sm:$0xf]
      %v549 = vld [vmem:[%s540 + $0x20] sm:$0xf]
      %v550 = vld [vmem:[%s540 + $0x24] sm:$0xf]
      %v551 = vld [vmem:[%s540 + $0x28] sm:$0xf]
      %v552 = vld [vmem:[%s540 + $0x2c] sm:$0xf]
      %v553 = vld [vmem:[%s540 + $0x30] sm:$0xf]
      %v554 = vld [vmem:[%s540 + $0x34] sm:$0xf]
      %v555 = vld [vmem:[%s540 + $0x38] sm:$0xf]
      %v556 = vld [vmem:[%s540 + $0x3c] sm:$0xf]
      %v573 = vunpack.c.l.b16 %v541
      %v574 = vunpack.c.l.b16 %v542
      %v575 = vunpack.c.l.b16 %v543
      %v576 = vunpack.c.l.b16 %v544
      %v577 = vunpack.c.l.b16 %v545
      %v578 = vunpack.c.l.b16 %v546
      %v579 = vunpack.c.l.b16 %v547
      %v580 = vunpack.c.l.b16 %v548
      %v581 = vunpack.c.l.b16 %v549
      %v582 = vunpack.c.l.b16 %v550
      %v583 = vunpack.c.l.b16 %v551
      %v584 = vunpack.c.l.b16 %v552
      %v585 = vunpack.c.l.b16 %v553
      %v586 = vunpack.c.l.b16 %v554
      %v587 = vunpack.c.l.b16 %v555
      %v588 = vunpack.c.l.b16 %v556
      %v589 = vpack.c.b16 %v574, %v573
      %v590 = vpack.c.b16 %v576, %v575
      %v591 = vpack.c.b16 %v578, %v577
      %v592 = vpack.c.b16 %v580, %v579
      %v593 = vpack.c.b16 %v582, %v581
      %v594 = vpack.c.b16 %v584, %v583
      %v595 = vpack.c.b16 %v586, %v585
      %v596 = vpack.c.b16 %v588, %v587
      %605 = vmatprep.subr.bf16.mxu0 0
      %606 = vmatpush1.bf16.msra.mxu0 %v589
      %607 = vmatprep.subr.bf16.mxu0 0
      %608 = vmatpush1.bf16.msra.mxu0 %v590
      %609 = vmatprep.subr.bf16.mxu0 0
      %610 = vmatpush1.bf16.msra.mxu0 %v591
      %611 = vmatprep.subr.bf16.mxu0 0
      %612 = vmatpush1.bf16.msra.mxu0 %v592
      %613 = vmatprep.subr.bf16.mxu0 0
      %614 = vmatpush1.bf16.msra.mxu0 %v593
      %615 = vmatprep.subr.bf16.mxu0 0
      %616 = vmatpush1.bf16.msra.mxu0 %v594
      %617 = vmatprep.subr.bf16.mxu0 0
      %618 = vmatpush1.bf16.msra.mxu0 %v595
      %619 = vmatprep.subr.bf16.mxu0 0
      %620 = vmatpush1.bf16.msra.mxu0 %v596
      %621 = vmatprep.subr.bf16.mxu0 0
      %622 = vmatpush1.bf16.msra.mxu0 0
      %623 = vmatprep.subr.bf16.mxu0 0
      %624 = vmatpush1.bf16.msra.mxu0 0
      %625 = vmatprep.subr.bf16.mxu0 0
      %626 = vmatpush1.bf16.msra.mxu0 0
      %627 = vmatprep.subr.bf16.mxu0 0
      %628 = vmatpush1.bf16.msra.mxu0 0
      %629 = vmatprep.subr.bf16.mxu0 0
      %630 = vmatpush1.bf16.msra.mxu0 0
      %631 = vmatprep.subr.bf16.mxu0 0
      %632 = vmatpush1.bf16.msra.mxu0 0
      %633 = vmatprep.subr.bf16.mxu0 0
      %634 = vmatpush1.bf16.msra.mxu0 0
      %635 = vmatprep.subr.bf16.mxu0 0
      %636 = vmatpush1.bf16.msra.mxu0 0
      %637 = vmatprep.mubr.bf16.mxu0 0
      %638 = vmatmul.mubr.bf16.gmra.mrb[0].mxu0 %v539
      %v639 = vpop.f32.mrb[0].mxu0
      %v640 = vadd.f32 0.0, %v639
      %v641 = vpop.f32.mrb[0].mxu0
      %v642 = vpop.f32.mrb[0].mxu0
      %v643 = vpop.f32.mrb[0].mxu0
      %644 = vdwg.mxu0
      %v661 = vunpack.c.l.b16 %v523
      %v662 = vunpack.c.l.b16 %v524
      %v663 = vunpack.c.l.b16 %v525
      %v664 = vunpack.c.l.b16 %v526
      %v665 = vunpack.c.l.b16 %v527
      %v666 = vunpack.c.l.b16 %v528
      %v667 = vunpack.c.l.b16 %v529
      %v668 = vunpack.c.l.b16 %v530
      %v669 = vunpack.c.l.b16 %v531
      %v670 = vunpack.c.l.b16 %v532
      %v671 = vunpack.c.l.b16 %v533
      %v672 = vunpack.c.l.b16 %v534
      %v673 = vunpack.c.l.b16 %v535
      %v674 = vunpack.c.l.b16 %v536
      %v675 = vunpack.c.l.b16 %v537
      %v676 = vunpack.c.l.b16 %v538
      %v677 = vpack.c.b16 %v662, %v661
      %v678 = vpack.c.b16 %v664, %v663
      %v679 = vpack.c.b16 %v666, %v665
      %v680 = vpack.c.b16 %v668, %v667
      %v681 = vpack.c.b16 %v670, %v669
      %v682 = vpack.c.b16 %v672, %v671
      %v683 = vpack.c.b16 %v674, %v673
      %v684 = vpack.c.b16 %v676, %v675
      %693 = vmatprep.subr.bf16.mxu0 0
      %694 = vmatpush1.bf16.msra.mxu0 %v677
      %695 = vmatprep.subr.bf16.mxu0 0
      %696 = vmatpush1.bf16.msra.mxu0 %v678
      %697 = vmatprep.subr.bf16.mxu0 0
      %698 = vmatpush1.bf16.msra.mxu0 %v679
      %699 = vmatprep.subr.bf16.mxu0 0
      %700 = vmatpush1.bf16.msra.mxu0 %v680
      %701 = vmatprep.subr.bf16.mxu0 0
      %702 = vmatpush1.bf16.msra.mxu0 %v681
      %703 = vmatprep.subr.bf16.mxu0 0
      %704 = vmatpush1.bf16.msra.mxu0 %v682
      %705 = vmatprep.subr.bf16.mxu0 0
      %706 = vmatpush1.bf16.msra.mxu0 %v683
      %707 = vmatprep.subr.bf16.mxu0 0
      %708 = vmatpush1.bf16.msra.mxu0 %v684
      %709 = vmatprep.subr.bf16.mxu0 0
      %710 = vmatpush1.bf16.msra.mxu0 0
      %711 = vmatprep.subr.bf16.mxu0 0
      %712 = vmatpush1.bf16.msra.mxu0 0
      %713 = vmatprep.subr.bf16.mxu0 0
      %714 = vmatpush1.bf16.msra.mxu0 0
      %715 = vmatprep.subr.bf16.mxu0 0
      %716 = vmatpush1.bf16.msra.mxu0 0
      %717 = vmatprep.subr.bf16.mxu0 0
      %718 = vmatpush1.bf16.msra.mxu0 0
      %719 = vmatprep.subr.bf16.mxu0 0
      %720 = vmatpush1.bf16.msra.mxu0 0
      %721 = vmatprep.subr.bf16.mxu0 0
      %722 = vmatpush1.bf16.msra.mxu0 0
      %723 = vmatprep.subr.bf16.mxu0 0
      %724 = vmatpush1.bf16.msra.mxu0 0
      %725 = vmatprep.mubr.bf16.mxu0 0
      %726 = vmatmul.mubr.bf16.gmra.mrb[0].mxu0 %v522
      %v727 = vpop.f32.mrb[0].mxu0
      %v728 = vadd.f32 %v640, %v727
      %v729 = vpop.f32.mrb[0].mxu0
      %v730 = vpop.f32.mrb[0].mxu0
      %v731 = vpop.f32.mrb[0].mxu0
      %732 = vdwg.mxu0
      %v733 = vpack.c.bf16 %v516, %v516
      %s734 = scalar_lea.vmem %s3, 128
      %v735 = vld [vmem:[%s734] sm:$0xf]
      %v736 = vld [vmem:[%s734 + $0x4] sm:$0xf]
      %v737 = vld [vmem:[%s734 + $0x8] sm:$0xf]
      %v738 = vld [vmem:[%s734 + $0xc] sm:$0xf]
      %v739 = vld [vmem:[%s734 + $0x10] sm:$0xf]
      %v740 = vld [vmem:[%s734 + $0x14] sm:$0xf]
      %v741 = vld [vmem:[%s734 + $0x18] sm:$0xf]
      %v742 = vld [vmem:[%s734 + $0x1c] sm:$0xf]
      %v743 = vld [vmem:[%s734 + $0x20] sm:$0xf]
      %v744 = vld [vmem:[%s734 + $0x24] sm:$0xf]
      %v745 = vld [vmem:[%s734 + $0x28] sm:$0xf]
      %v746 = vld [vmem:[%s734 + $0x2c] sm:$0xf]
      %v747 = vld [vmem:[%s734 + $0x30] sm:$0xf]
      %v748 = vld [vmem:[%s734 + $0x34] sm:$0xf]
      %v749 = vld [vmem:[%s734 + $0x38] sm:$0xf]
      %v750 = vld [vmem:[%s734 + $0x3c] sm:$0xf]
      %v767 = vunpack.c.l.b16 %v735
      %v768 = vunpack.c.l.b16 %v736
      %v769 = vunpack.c.l.b16 %v737
      %v770 = vunpack.c.l.b16 %v738
      %v771 = vunpack.c.l.b16 %v739
      %v772 = vunpack.c.l.b16 %v740
      %v773 = vunpack.c.l.b16 %v741
      %v774 = vunpack.c.l.b16 %v742
      %v775 = vunpack.c.l.b16 %v743
      %v776 = vunpack.c.l.b16 %v744
      %v777 = vunpack.c.l.b16 %v745
      %v778 = vunpack.c.l.b16 %v746
      %v779 = vunpack.c.l.b16 %v747
      %v780 = vunpack.c.l.b16 %v748
      %v781 = vunpack.c.l.b16 %v749
      %v782 = vunpack.c.l.b16 %v750
      %v783 = vpack.c.b16 %v768, %v767
      %v784 = vpack.c.b16 %v770, %v769
      %v785 = vpack.c.b16 %v772, %v771
      %v786 = vpack.c.b16 %v774, %v773
      %v787 = vpack.c.b16 %v776, %v775
      %v788 = vpack.c.b16 %v778, %v777
      %v789 = vpack.c.b16 %v780, %v779
      %v790 = vpack.c.b16 %v782, %v781
      %799 = vmatprep.subr.bf16.mxu0 0
      %800 = vmatpush1.bf16.msra.mxu0 %v783
      %801 = vmatprep.subr.bf16.mxu0 0
      %802 = vmatpush1.bf16.msra.mxu0 %v784
      %803 = vmatprep.subr.bf16.mxu0 0
      %804 = vmatpush1.bf16.msra.mxu0 %v785
      %805 = vmatprep.subr.bf16.mxu0 0
      %806 = vmatpush1.bf16.msra.mxu0 %v786
      %807 = vmatprep.subr.bf16.mxu0 0
      %808 = vmatpush1.bf16.msra.mxu0 %v787
      %809 = vmatprep.subr.bf16.mxu0 0
      %810 = vmatpush1.bf16.msra.mxu0 %v788
      %811 = vmatprep.subr.bf16.mxu0 0
      %812 = vmatpush1.bf16.msra.mxu0 %v789
      %813 = vmatprep.subr.bf16.mxu0 0
      %814 = vmatpush1.bf16.msra.mxu0 %v790
      %815 = vmatprep.subr.bf16.mxu0 0
      %816 = vmatpush1.bf16.msra.mxu0 0
      %817 = vmatprep.subr.bf16.mxu0 0
      %818 = vmatpush1.bf16.msra.mxu0 0
      %819 = vmatprep.subr.bf16.mxu0 0
      %820 = vmatpush1.bf16.msra.mxu0 0
      %821 = vmatprep.subr.bf16.mxu0 0
      %822 = vmatpush1.bf16.msra.mxu0 0
      %823 = vmatprep.subr.bf16.mxu0 0
      %824 = vmatpush1.bf16.msra.mxu0 0
      %825 = vmatprep.subr.bf16.mxu0 0
      %826 = vmatpush1.bf16.msra.mxu0 0
      %827 = vmatprep.subr.bf16.mxu0 0
      %828 = vmatpush1.bf16.msra.mxu0 0
      %829 = vmatprep.subr.bf16.mxu0 0
      %830 = vmatpush1.bf16.msra.mxu0 0
      %831 = vmatprep.mubr.bf16.mxu0 0
      %832 = vmatmul.mubr.bf16.gmra.mrb[0].mxu0 %v733
      %v833 = vpop.f32.mrb[0].mxu0
      %v834 = vadd.f32 0.0, %v833
      %v835 = vpop.f32.mrb[0].mxu0
      %v836 = vpop.f32.mrb[0].mxu0
      %v837 = vpop.f32.mrb[0].mxu0
      %838 = vdwg.mxu0
      %v839 = vadd.f32 %v728, %v834
      %v840 = vld [vmem:[%s4] sm:$0x1]
      %v842 = vlaneseq
      %v843 = vshrl.u32 %v842, 7
      %v844 = vsub.s32 0, %v843
      %v845 = vrot.slane %v840, %v844
      %v847 = vadd.f32 %v839, %v845
      %vm848 = vcmp.ge.f32.partialorder %v847, 0.0
      %v849 = vmul.f32 %v847, 0.9
      %v850 = vsel %vm848, %v847, %v849
      %v851 = vpack.c.bf16 %v850, %v850
      %852 = vst [vmem:[%s222] sm:$0xf] %v851
      %p853 = scmp.lt.s32.totalorder %s16, 1
      %s854 = scalar_select %p853, %s16, 1
      %s855 = smul.addr %s854, 4
      %s856 = scalar_lea.vmem %s5, %s855
      // Predicated region
      $region41: #{cnn_forward.2} parent=39 // pred_check
        %p857 = pneg %p144
      $region42: #{cnn_forward.2} parent=39 // pred_check_branch
        %859 = sbr.rel (%p857) target = $region44
      $region43: #{cnn_forward.2} parent=39 // pred_region
        _
      $region44: #{cnn_forward.2} parent=39 // pred_fallthru
        _
    $region40: #{cnn_forward.2} parent=5 // pred_fallthru
      _
    %p860 = scmp.le.s32.totalorder 2, %s11
    // Predicated region
    $region45: #{cnn_forward.2} parent=5 // pred_check
      %p861 = pneg %p860
    $region46: #{cnn_forward.2} parent=5 // pred_check_branch
      %863 = sbr.rel (%p861) target = $region48
    $region47: #{cnn_forward.2} parent=5 // pred_region
      %s864 = ssub.s32 %s11, 2
      // Predicated region
      $region49: #{cnn_forward.2} parent=47 // pred_check
        %p865 = pneg %p150
      $region50: #{cnn_forward.2} parent=47 // pred_check_branch
        %867 = sbr.rel (%p865) target = $region52
      $region51: #{cnn_forward.2} parent=47 // pred_region
        %p868 = scmp.lt.s32.totalorder %s17, 1
        %s869 = scalar_select %p868, %s17, 1
        %s870 = smul.addr %s869, 4
        %s871 = scalar_lea.vmem %s5, %s870
      $region52: #{cnn_forward.2} parent=47 // pred_fallthru
        _
    $region48: #{cnn_forward.2} parent=5 // pred_fallthru
      _
  $region6: #{cnn_forward.2} parent=0 // loop_footer
    %s15 = sadd.s32 1, %s11
  $region7: #{cnn_forward.2} parent=0 // loop_footer_branch
    %10 = sbr.rel target = $region3
  $region8: #{cnn_forward.2} parent=0 // loop_exit
    _

// kernel: cnn_forward.3
$region0: #{cnn_forward.3}
  #allocation0 [shape = 'u32[]', space=smem, size = 0x4, offset = 0x4, fixed_abs, tag = 'smem constant byte address 0x4 - core index']
  #allocation1 [shape = 'u32[144,128]{1,0:T(1,128)}', space=vmem, size = 0x12000, scoped, tag = 'internal scratch']
  #allocation2 [shape = 'f32[2,128]{1,0:T(2,128)}', space=vmem, size = 0x400, scoped, tag = 'scratch operand']
  %s0 = inlined_call_operand.vmem [shape: bf16[2,1024], index: 0, kind: input, shape index: {}]
  %s1 = inlined_call_operand.vmem [shape: bf16[1024,128], index: 1, kind: input, shape index: {}]
  %s2 = inlined_call_operand.vmem [shape: f32[1,128], index: 2, kind: input, shape index: {}]
  %s3 = inlined_call_operand.vmem [shape: bf16[128,128], index: 3, kind: input, shape index: {}]
  %s4 = inlined_call_operand.vmem [shape: f32[1,128], index: 4, kind: input, shape index: {}]
  %s5 = inlined_call_operand.hbm [shape: f32[2,128], index: 5, kind: output, shape index: {}]
  %s6 = sld [smem:[#allocation0]]
  $region61: #{cnn_forward.3} parent=0
    _
  %s8 = ssub.s32 1, %s6
  %s9 = scalar_select 0, %s8, %s6
  $region1: #{cnn_forward.3} parent=0
    #allocation3 [shape = 'u8[1024]{0}', space=vmem, size = 0x400, scoped, tag = 'output window, operand 0, single buffered']
    #allocation4 [shape = 's32[2]{0}', space=sflag, size = 0x8, scoped, tag = 'scoped memory for cnn_forward.3']
    %10 = vsyncpa [#allocation4], 0
    loop: start=0, step=1, limit=4
    $region2: #{cnn_forward.3} parent=1 // loop_pre_header
      _
    $region3: #{cnn_forward.3} parent=1 // loop_header
      %s12 = sphi 0, %s16
      %p13 = scmp.ge.s32.totalorder %s12, 4
      %s19 = sphi 0, %s31
      %s20 = sphi 0, %s27
      %s21 = sphi 0, %s19
      %s22 = sphi 0, %s20
      %s23 = sphi 0, %s21
      %s24 = sphi 0, %s22
      %s36 = sphi 0, %s38
      %s39 = sphi 0, %s36
      %s40 = sphi 0, %s39
      %s56 = sphi 0, %s40
      %s62 = sphi 0, %s64
      %s65 = sphi 0, %s62
      %s66 = sphi 0, %s65
      %s82 = sphi 0, %s66
      %s86 = sphi 0, %s86
      %s88 = sphi 0, %s86
      %s89 = sphi 0, %s88
      %s103 = sphi 0, %s89
      %s107 = sphi 0, %s107
      %s109 = sphi 0, %s107
      %s110 = sphi 0, %s109
      %s124 = sphi 0, %s110
      %s128 = sphi 0, %s128
      %s130 = sphi 0, %s128
      %s131 = sphi 0, %s130
      %s145 = sphi 0, %s131
      %s151 = sphi 0, %s153
      %s154 = sphi 0, %s151
      %s155 = sphi 0, %s154
      %s171 = sphi 0, %s155
    $region4: #{cnn_forward.3} parent=1 // loop_header_branch
      %15 = sbr.rel (%p13) target = $region8
    $region5: #{cnn_forward.3} parent=1 // loop_body
      %s17 = ssub.s32 %s12, 1
      %s18 = ssub.s32 %s12, 2
      %s25 = sadd.s32 1, %s20
      %p26 = scmp.ge.s32.totalorder %s25, 2
      %s27 = scalar_select %p26, 0, %s25
      %s28 = sadd.s32 1, %s19
      %s29 = scalar_select %p26, %s28, %s19
      %p30 = scmp.ge.s32.totalorder %s29, 1
      %s31 = scalar_select %p30, 0, %s29
      %s32 = ssub.s32 %s19, %s31
      %s33 = ssub.s32 %s20, %s27
      %s34 = sor.u32 %s32, %s33
      %p35 = scmp.eq.s32.totalorder %s34, 0
      %s37 = sadd.s32 %s36, 1
      %s38 = scalar_select %p35, %s36, %s37
      %p41 = pneg %p35
      %p42 = scmp.eq.s32.totalorder %s12, 1
      %p43 = por %p41, %p42
      %p44 = scmp.ne.s32.totalorder %s36, %s39
      %p45 = scmp.eq.s32.totalorder %s12, 0
      %p46 = por %p44, %p45
      %p47 = scmp.ne.s32.totalorder %s36, %s39
      %p48 = scmp.eq.s32.totalorder %s17, 1
      %p49 = por %p47, %p48
      %p50 = scmp.ne.s32.totalorder %s39, %s40
      %p51 = scmp.eq.s32.totalorder %s17, 0
      %p52 = por %p50, %p51
      %p53 = scmp.ne.s32.totalorder %s39, %s40
      %p54 = scmp.eq.s32.totalorder %s18, 1
      %p55 = por %p53, %p54
      %p57 = scmp.ne.s32.totalorder %s40, %s56
      %p58 = scmp.eq.s32.totalorder %s18, 0
      %p59 = por %p57, %p58
      %s60 = ssub.s32 %s20, %s27
      %p61 = scmp.eq.s32.totalorder %s60, 0
      %s63 = sadd.s32 %s62, 1
      %s64 = scalar_select %p61, %s62, %s63
      %p67 = pneg %p61
      %p68 = scmp.eq.s32.totalorder %s12, 1
      %p69 = por %p67, %p68
      %p70 = scmp.ne.s32.totalorder %s62, %s65
      %p71 = scmp.eq.s32.totalorder %s12, 0
      %p72 = por %p70, %p71
      %p73 = scmp.ne.s32.totalorder %s62, %s65
      %p74 = scmp.eq.s32.totalorder %s17, 1
      %p75 = por %p73, %p74
      %p76 = scmp.ne.s32.totalorder %s65, %s66
      %p77 = scmp.eq.s32.totalorder %s17, 0
      %p78 = por %p76, %p77
      %p79 = scmp.ne.s32.totalorder %s65, %s66
      %p80 = scmp.eq.s32.totalorder %s18, 1
      %p81 = por %p79, %p80
      %p83 = scmp.ne.s32.totalorder %s66, %s82
      %p84 = scmp.eq.s32.totalorder %s18, 0
      %p85 = por %p83, %p84
      %s87 = sadd.s32 %s86, 1
      %p90 = scmp.eq.s32.totalorder %s12, 1
      %p91 = scmp.ne.s32.totalorder %s86, %s88
      %p92 = scmp.eq.s32.totalorder %s12, 0
      %p93 = por %p91, %p92
      %p94 = scmp.ne.s32.totalorder %s86, %s88
      %p95 = scmp.eq.s32.totalorder %s17, 1
      %p96 = por %p94, %p95
      %p97 = scmp.ne.s32.totalorder %s88, %s89
      %p98 = scmp.eq.s32.totalorder %s17, 0
      %p99 = por %p97, %p98
      %p100 = scmp.ne.s32.totalorder %s88, %s89
      %p101 = scmp.eq.s32.totalorder %s18, 1
      %p102 = por %p100, %p101
      %p104 = scmp.ne.s32.totalorder %s89, %s103
      %p105 = scmp.eq.s32.totalorder %s18, 0
      %p106 = por %p104, %p105
      %s108 = sadd.s32 %s107, 1
      %p111 = scmp.eq.s32.totalorder %s12, 1
      %p112 = scmp.ne.s32.totalorder %s107, %s109
      %p113 = scmp.eq.s32.totalorder %s12, 0
      %p114 = por %p112, %p113
      %p115 = scmp.ne.s32.totalorder %s107, %s109
      %p116 = scmp.eq.s32.totalorder %s17, 1
      %p117 = por %p115, %p116
      %p118 = scmp.ne.s32.totalorder %s109, %s110
      %p119 = scmp.eq.s32.totalorder %s17, 0
      %p120 = por %p118, %p119
      %p121 = scmp.ne.s32.totalorder %s109, %s110
      %p122 = scmp.eq.s32.totalorder %s18, 1
      %p123 = por %p121, %p122
      %p125 = scmp.ne.s32.totalorder %s110, %s124
      %p126 = scmp.eq.s32.totalorder %s18, 0
      %p127 = por %p125, %p126
      %s129 = sadd.s32 %s128, 1
      %p132 = scmp.eq.s32.totalorder %s12, 1
      %p133 = scmp.ne.s32.totalorder %s128, %s130
      %p134 = scmp.eq.s32.totalorder %s12, 0
      %p135 = por %p133, %p134
      %p136 = scmp.ne.s32.totalorder %s128, %s130
      %p137 = scmp.eq.s32.totalorder %s17, 1
      %p138 = por %p136, %p137
      %p139 = scmp.ne.s32.totalorder %s130, %s131
      %p140 = scmp.eq.s32.totalorder %s17, 0
      %p141 = por %p139, %p140
      %p142 = scmp.ne.s32.totalorder %s130, %s131
      %p143 = scmp.eq.s32.totalorder %s18, 1
      %p144 = por %p142, %p143
      %p146 = scmp.ne.s32.totalorder %s131, %s145
      %p147 = scmp.eq.s32.totalorder %s18, 0
      %p148 = por %p146, %p147
      %s149 = ssub.s32 %s19, %s31
      %p150 = scmp.eq.s32.totalorder %s149, 0
      %s152 = sadd.s32 %s151, 1
      %s153 = scalar_select %p150, %s151, %s152
      %p156 = pneg %p150
      %p157 = scmp.eq.s32.totalorder %s12, 1
      %p158 = por %p156, %p157
      %p159 = scmp.ne.s32.totalorder %s151, %s154
      %p160 = scmp.eq.s32.totalorder %s12, 0
      %p161 = por %p159, %p160
      %p162 = scmp.ne.s32.totalorder %s151, %s154
      %p163 = scmp.eq.s32.totalorder %s17, 1
      %p164 = por %p162, %p163
      %p165 = scmp.ne.s32.totalorder %s154, %s155
      %p166 = scmp.eq.s32.totalorder %s17, 0
      %p167 = por %p165, %p166
      %p168 = scmp.ne.s32.totalorder %s154, %s155
      %p169 = scmp.eq.s32.totalorder %s18, 1
      %p170 = por %p168, %p169
      %p172 = scmp.ne.s32.totalorder %s155, %s171
      %p173 = scmp.eq.s32.totalorder %s18, 0
      %p174 = por %p172, %p173
      %p175 = scmp.le.s32.totalorder 1, %s12
      %p176 = scmp.lt.s32.totalorder %s12, 3
      %p177 = pnand %p175, %p176
      %p178 = pneg %p177
      // Predicated region
      $region9: #{cnn_forward.3} parent=5 // pred_check
        _
      $region10: #{cnn_forward.3} parent=5 // pred_check_branch
        %180 = sbr.rel (%p177) target = $region12
      $region11: #{cnn_forward.3} parent=5 // pred_region
        %s181 = ssub.s32 %s12, 1
        // Predicated region
        $region13: #{cnn_forward.3} parent=11 // pred_check
          %p182 = pneg %p99
        $region14: #{cnn_forward.3} parent=11 // pred_check_branch
          %184 = sbr.rel (%p182) target = $region16
        $region15: #{cnn_forward.3} parent=11 // pred_region
          _
        $region16: #{cnn_forward.3} parent=11 // pred_fallthru
          _
        // Predicated region
        $region17: #{cnn_forward.3} parent=11 // pred_check
          %p185 = pneg %p120
        $region18: #{cnn_forward.3} parent=11 // pred_check_branch
          %187 = sbr.rel (%p185) target = $region20
        $region19: #{cnn_forward.3} parent=11 // pred_region
          _
        $region20: #{cnn_forward.3} parent=11 // pred_fallthru
          _
        // Predicated region
        $region21: #{cnn_forward.3} parent=11 // pred_check
          %p188 = pneg %p141
        $region22: #{cnn_forward.3} parent=11 // pred_check_branch
          %190 = sbr.rel (%p188) target = $region24
        $region23: #{cnn_forward.3} parent=11 // pred_region
          _
        $region24: #{cnn_forward.3} parent=11 // pred_fallthru
          _
      $region12: #{cnn_forward.3} parent=5 // pred_fallthru
        _
      %p191 = scmp.lt.s32.totalorder %s12, 2
      // Predicated region
      $region25: #{cnn_forward.3} parent=5 // pred_check
        %p192 = pneg %p191
      $region26: #{cnn_forward.3} parent=5 // pred_check_branch
        %194 = sbr.rel (%p192) target = $region28
      $region27: #{cnn_forward.3} parent=5 // pred_region
        // Predicated region
        $region29: #{cnn_forward.3} parent=27 // pred_check
          %p195 = pneg %p46
        $region30: #{cnn_forward.3} parent=27 // pred_check_branch
          %197 = sbr.rel (%p195) target = $region32
        $region31: #{cnn_forward.3} parent=27 // pred_region
          %s198 = smul.u32 4, %s20
          %p199 = scmp.lt.s32.totalorder %s19, 0
          %s200 = scalar_select %p199, %s19, 0
          %p201 = scmp.lt.s32.totalorder %s198, 7
          %s202 = scalar_select %p201, %s198, 7
          %s203 = smul.addr %s200, 8
          %s204 = sadd.s32 %s202, %s203
          %s205 = scalar_lea.vmem %s0, %s204
          %s206 = smul.u32 4, %s20
        $region32: #{cnn_forward.3} parent=27 // pred_fallthru
          _
        // Predicated region
        $region33: #{cnn_forward.3} parent=27 // pred_check
          %p207 = pneg %p72
        $region34: #{cnn_forward.3} parent=27 // pred_check_branch
          %209 = sbr.rel (%p207) target = $region36
        $region35: #{cnn_forward.3} parent=27 // pred_region
          %s210 = smul.u32 64, %s20
          %p211 = scmp.lt.s32.totalorder %s210, 127
          %s212 = scalar_select %p211, %s210, 127
          %s213 = smul.addr %s212, 4
          %s214 = scalar_lea.vmem %s1, %s213
          %s215 = smul.u32 64, %s20
        $region36: #{cnn_forward.3} parent=27 // pred_fallthru
          _
      $region28: #{cnn_forward.3} parent=5 // pred_fallthru
        _
      %p216 = scmp.le.s32.totalorder 1, %s12
      %p217 = scmp.lt.s32.totalorder %s12, 3
      %p218 = pnand %p216, %p217
      %p219 = pneg %p218
      // Predicated region
      $region37: #{cnn_forward.3} parent=5 // pred_check
        _
      $region38: #{cnn_forward.3} parent=5 // pred_check_branch
        %221 = sbr.rel (%p218) target = $region40
      $region39: #{cnn_forward.3} parent=5 // pred_region
        %s222 = ssub.s32 %s12, 1
        %s223 = smul.u32 4, %s22
        %p224 = scmp.lt.s32.totalorder %s21, 0
        %s225 = scalar_select %p224, %s21, 0
        %p226 = scmp.lt.s32.totalorder %s223, 7
        %s227 = scalar_select %p226, %s223, 7
        %s228 = smul.addr %s225, 8
        %s229 = sadd.s32 %s227, %s228
        %s230 = scalar_lea.vmem %s0, %s229
        %p231 = pneg %p52
        %p232 = pneg %p49
        %s233 = smul.u32 64, %s22
        %p234 = scmp.lt.s32.totalorder %s233, 127
        %s235 = scalar_select %p234, %s233, 127
        %s236 = smul.addr %s235, 4
        %s237 = scalar_lea.vmem %s1, %s236
        %p238 = pneg %p78
        %p239 = pneg %p75
        %p240 = pneg %p99
        %p241 = pneg %p96
        %p242 = pneg %p120
        %p243 = pneg %p117
        %p244 = pneg %p141
        %p245 = pneg %p138
        %p246 = pneg %p167
        %p247 = pneg %p164
        %s248 = smul.u32 4, %s22
        %p249 = scmp.lt.s32.totalorder %s21, 0
        %s250 = scalar_select %p249, %s21, 0
        %p251 = scmp.lt.s32.totalorder %s248, 7
        %s252 = scalar_select %p251, %s248, 7
        %s253 = smul.addr %s250, 8
        %s254 = sadd.s32 %s252, %s253
        %s255 = scalar_lea.vmem %s0, %s254
        %s256 = smul.u32 4, %s22
        %s257 = smul.u32 64, %s22
        %p258 = scmp.lt.s32.totalorder %s257, 127
        %s259 = scalar_select %p258, %s257, 127
        %s260 = smul.addr %s259, 4
        %s261 = scalar_lea.vmem %s1, %s260
        %s262 = smul.u32 64, %s22
        %p264 = scmp.eq.s32.totalorder %s22, 0
        // Predicated region
        $region41: #{cnn_forward.3} parent=39 // pred_check
          %p265 = pneg %p264
        $region42: #{cnn_forward.3} parent=39 // pred_check_branch
          %267 = sbr.rel (%p265) target = $region44
        $region43: #{cnn_forward.3} parent=39 // pred_region
          %268 = vst [vmem:[#allocation2] sm:$0x3] 0.0
        $region44: #{cnn_forward.3} parent=39 // pred_fallthru
          _
        %v269 = vld [vmem:[#allocation2] sm:$0x3]
        %v270 = vld [vmem:[%s255] sm:$0xf]
        %v271 = vld [vmem:[%s261] sm:$0xf]
        %v272 = vld [vmem:[%s261 + $0x4] sm:$0xf]
        %v273 = vld [vmem:[%s261 + $0x8] sm:$0xf]
        %v274 = vld [vmem:[%s261 + $0xc] sm:$0xf]
        %v275 = vld [vmem:[%s261 + $0x10] sm:$0xf]
        %v276 = vld [vmem:[%s261 + $0x14] sm:$0xf]
        %v277 = vld [vmem:[%s261 + $0x18] sm:$0xf]
        %v278 = vld [vmem:[%s261 + $0x1c] sm:$0xf]
        %v279 = vld [vmem:[%s261 + $0x20] sm:$0xf]
        %v280 = vld [vmem:[%s261 + $0x24] sm:$0xf]
        %v281 = vld [vmem:[%s261 + $0x28] sm:$0xf]
        %v282 = vld [vmem:[%s261 + $0x2c] sm:$0xf]
        %v283 = vld [vmem:[%s261 + $0x30] sm:$0xf]
        %v284 = vld [vmem:[%s261 + $0x34] sm:$0xf]
        %v285 = vld [vmem:[%s261 + $0x38] sm:$0xf]
        %v286 = vld [vmem:[%s261 + $0x3c] sm:$0xf]
        %v287 = vld [vmem:[%s261 + $0x40] sm:$0xf]
        %v288 = vld [vmem:[%s261 + $0x44] sm:$0xf]
        %v289 = vld [vmem:[%s261 + $0x48] sm:$0xf]
        %v290 = vld [vmem:[%s261 + $0x4c] sm:$0xf]
        %v291 = vld [vmem:[%s261 + $0x50] sm:$0xf]
        %v292 = vld [vmem:[%s261 + $0x54] sm:$0xf]
        %v293 = vld [vmem:[%s261 + $0x58] sm:$0xf]
        %v294 = vld [vmem:[%s261 + $0x5c] sm:$0xf]
        %v295 = vld [vmem:[%s261 + $0x60] sm:$0xf]
        %v296 = vld [vmem:[%s261 + $0x64] sm:$0xf]
        %v297 = vld [vmem:[%s261 + $0x68] sm:$0xf]
        %v298 = vld [vmem:[%s261 + $0x6c] sm:$0xf]
        %v299 = vld [vmem:[%s261 + $0x70] sm:$0xf]
        %v300 = vld [vmem:[%s261 + $0x74] sm:$0xf]
        %v301 = vld [vmem:[%s261 + $0x78] sm:$0xf]
        %v302 = vld [vmem:[%s261 + $0x7c] sm:$0xf]
        %v303 = vld [vmem:[%s261 + $0x80] sm:$0xf]
        %v304 = vld [vmem:[%s261 + $0x84] sm:$0xf]
        %v305 = vld [vmem:[%s261 + $0x88] sm:$0xf]
        %v306 = vld [vmem:[%s261 + $0x8c] sm:$0xf]
        %v307 = vld [vmem:[%s261 + $0x90] sm:$0xf]
        %v308 = vld [vmem:[%s261 + $0x94] sm:$0xf]
        %v309 = vld [vmem:[%s261 + $0x98] sm:$0xf]
        %v310 = vld [vmem:[%s261 + $0x9c] sm:$0xf]
        %v311 = vld [vmem:[%s261 + $0xa0] sm:$0xf]
        %v312 = vld [vmem:[%s261 + $0xa4] sm:$0xf]
        %v313 = vld [vmem:[%s261 + $0xa8] sm:$0xf]
        %v314 = vld [vmem:[%s261 + $0xac] sm:$0xf]
        %v315 = vld [vmem:[%s261 + $0xb0] sm:$0xf]
        %v316 = vld [vmem:[%s261 + $0xb4] sm:$0xf]
        %v317 = vld [vmem:[%s261 + $0xb8] sm:$0xf]
        %v318 = vld [vmem:[%s261 + $0xbc] sm:$0xf]
        %v319 = vld [vmem:[%s261 + $0xc0] sm:$0xf]
        %v320 = vld [vmem:[%s261 + $0xc4] sm:$0xf]
        %v321 = vld [vmem:[%s261 + $0xc8] sm:$0xf]
        %v322 = vld [vmem:[%s261 + $0xcc] sm:$0xf]
        %v323 = vld [vmem:[%s261 + $0xd0] sm:$0xf]
        %v324 = vld [vmem:[%s261 + $0xd4] sm:$0xf]
        %v325 = vld [vmem:[%s261 + $0xd8] sm:$0xf]
        %v326 = vld [vmem:[%s261 + $0xdc] sm:$0xf]
        %v327 = vld [vmem:[%s261 + $0xe0] sm:$0xf]
        %v328 = vld [vmem:[%s261 + $0xe4] sm:$0xf]
        %v329 = vld [vmem:[%s261 + $0xe8] sm:$0xf]
        %v330 = vld [vmem:[%s261 + $0xec] sm:$0xf]
        %v331 = vld [vmem:[%s261 + $0xf0] sm:$0xf]
        %v332 = vld [vmem:[%s261 + $0xf4] sm:$0xf]
        %v333 = vld [vmem:[%s261 + $0xf8] sm:$0xf]
        %v334 = vld [vmem:[%s261 + $0xfc] sm:$0xf]
        %v337 = vunpack.c.l.s4 1966171168
        %v338 = vunpack.c.0.s8 %v337
        %v339 = vlaneseq
        %v340 = vshrl.u32 %v339, 7
        %v341 = vsub.s32 %v338, %v340
        %v342 = vrot.slane %v270, %v341
        %v343 = vcombine.high %v342, %v342
        %v345 = vunpack.c.l.s4 1966171168
        %v346 = vunpack.c.0.s8 %v345
        %v347 = vlaneseq
        %v348 = vshrl.u32 %v347, 7
        %v349 = vsub.s32 %v346, %v348
        %v350 = vrot.slane %v342, %v349
        %v352 = vunpack.c.l.s4 1966171168
        %v353 = vunpack.c.0.s8 %v352
        %v354 = vlaneseq
        %v355 = vshrl.u32 %v354, 7
        %v356 = vsub.s32 %v353, %v355
        %v357 = vrot.slane %v343, %v356
        %v358 = vcombine.high %v350, %v350
        %v359 = vcombine.high %v357, %v357
        %v428 = vunpack.c.l.b16 %v271
        %v429 = vunpack.c.l.b16 %v272
        %v430 = vunpack.c.l.b16 %v273
        %v431 = vunpack.c.l.b16 %v274
        %v432 = vunpack.c.l.b16 %v275
        %v433 = vunpack.c.l.b16 %v276
        %v434 = vunpack.c.l.b16 %v277
        %v435 = vunpack.c.l.b16 %v278
        %v436 = vunpack.c.l.b16 %v279
        %v437 = vunpack.c.l.b16 %v280
        %v438 = vunpack.c.l.b16 %v281
        %v439 = vunpack.c.l.b16 %v282
        %v440 = vunpack.c.l.b16 %v283
        %v441 = vunpack.c.l.b16 %v284
        %v442 = vunpack.c.l.b16 %v285
        %v443 = vunpack.c.l.b16 %v286
        %v444 = vunpack.c.l.b16 %v287
        %v445 = vunpack.c.l.b16 %v288
        %v446 = vunpack.c.l.b16 %v289
        %v447 = vunpack.c.l.b16 %v290
        %v448 = vunpack.c.l.b16 %v291
        %v449 = vunpack.c.l.b16 %v292
        %v450 = vunpack.c.l.b16 %v293
        %v451 = vunpack.c.l.b16 %v294
        %v452 = vunpack.c.l.b16 %v295
        %v453 = vunpack.c.l.b16 %v296
        %v454 = vunpack.c.l.b16 %v297
        %v455 = vunpack.c.l.b16 %v298
        %v456 = vunpack.c.l.b16 %v299
        %v457 = vunpack.c.l.b16 %v300
        %v458 = vunpack.c.l.b16 %v301
        %v459 = vunpack.c.l.b16 %v302
        %v460 = vunpack.c.l.b16 %v303
        %v461 = vunpack.c.l.b16 %v304
        %v462 = vunpack.c.l.b16 %v305
        %v463 = vunpack.c.l.b16 %v306
        %v464 = vunpack.c.l.b16 %v307
        %v465 = vunpack.c.l.b16 %v308
        %v466 = vunpack.c.l.b16 %v309
        %v467 = vunpack.c.l.b16 %v310
        %v468 = vunpack.c.l.b16 %v311
        %v469 = vunpack.c.l.b16 %v312
        %v470 = vunpack.c.l.b16 %v313
        %v471 = vunpack.c.l.b16 %v314
        %v472 = vunpack.c.l.b16 %v315
        %v473 = vunpack.c.l.b16 %v316
        %v474 = vunpack.c.l.b16 %v317
        %v475 = vunpack.c.l.b16 %v318
        %v476 = vunpack.c.l.b16 %v319
        %v477 = vunpack.c.l.b16 %v320
        %v478 = vunpack.c.l.b16 %v321
        %v479 = vunpack.c.l.b16 %v322
        %v480 = vunpack.c.l.b16 %v323
        %v481 = vunpack.c.l.b16 %v324
        %v482 = vunpack.c.l.b16 %v325
        %v483 = vunpack.c.l.b16 %v326
        %v484 = vunpack.c.l.b16 %v327
        %v485 = vunpack.c.l.b16 %v328
        %v486 = vunpack.c.l.b16 %v329
        %v487 = vunpack.c.l.b16 %v330
        %v488 = vunpack.c.l.b16 %v331
        %v489 = vunpack.c.l.b16 %v332
        %v490 = vunpack.c.l.b16 %v333
        %v491 = vunpack.c.l.b16 %v334
        %v492 = vpack.c.b16 %v429, %v428
        %v493 = vpack.c.b16 %v431, %v430
        %v494 = vpack.c.b16 %v433, %v432
        %v495 = vpack.c.b16 %v435, %v434
        %v496 = vpack.c.b16 %v437, %v436
        %v497 = vpack.c.b16 %v439, %v438
        %v498 = vpack.c.b16 %v441, %v440
        %v499 = vpack.c.b16 %v443, %v442
        %v500 = vpack.c.b16 %v445, %v444
        %v501 = vpack.c.b16 %v447, %v446
        %v502 = vpack.c.b16 %v449, %v448
        %v503 = vpack.c.b16 %v451, %v450
        %v504 = vpack.c.b16 %v453, %v452
        %v505 = vpack.c.b16 %v455, %v454
        %v506 = vpack.c.b16 %v457, %v456
        %v507 = vpack.c.b16 %v459, %v458
        %v508 = vpack.c.b16 %v461, %v460
        %v509 = vpack.c.b16 %v463, %v462
        %v510 = vpack.c.b16 %v465, %v464
        %v511 = vpack.c.b16 %v467, %v466
        %v512 = vpack.c.b16 %v469, %v468
        %v513 = vpack.c.b16 %v471, %v470
        %v514 = vpack.c.b16 %v473, %v472
        %v515 = vpack.c.b16 %v475, %v474
        %v516 = vpack.c.b16 %v477, %v476
        %v517 = vpack.c.b16 %v479, %v478
        %v518 = vpack.c.b16 %v481, %v480
        %v519 = vpack.c.b16 %v483, %v482
        %v520 = vpack.c.b16 %v485, %v484
        %v521 = vpack.c.b16 %v487, %v486
        %v522 = vpack.c.b16 %v489, %v488
        %v523 = vpack.c.b16 %v491, %v490
        %556 = vmatprep.subr.bf16.mxu0 0
        %557 = vmatpush1.bf16.msra.mxu0 %v492
        %558 = vmatprep.subr.bf16.mxu0 0
        %559 = vmatpush1.bf16.msra.mxu0 %v493
        %560 = vmatprep.subr.bf16.mxu0 0
        %561 = vmatpush1.bf16.msra.mxu0 %v494
        %562 = vmatprep.subr.bf16.mxu0 0
        %563 = vmatpush1.bf16.msra.mxu0 %v495
        %564 = vmatprep.subr.bf16.mxu0 0
        %565 = vmatpush1.bf16.msra.mxu0 %v496
        %566 = vmatprep.subr.bf16.mxu0 0
        %567 = vmatpush1.bf16.msra.mxu0 %v497
        %568 = vmatprep.subr.bf16.mxu0 0
        %569 = vmatpush1.bf16.msra.mxu0 %v498
        %570 = vmatprep.subr.bf16.mxu0 0
        %571 = vmatpush1.bf16.msra.mxu0 %v499
        %572 = vmatprep.subr.bf16.mxu0 0
        %573 = vmatpush1.bf16.msra.mxu0 %v500
        %574 = vmatprep.subr.bf16.mxu0 0
        %575 = vmatpush1.bf16.msra.mxu0 %v501
        %576 = vmatprep.subr.bf16.mxu0 0
        %577 = vmatpush1.bf16.msra.mxu0 %v502
        %578 = vmatprep.subr.bf16.mxu0 0
        %579 = vmatpush1.bf16.msra.mxu0 %v503
        %580 = vmatprep.subr.bf16.mxu0 0
        %581 = vmatpush1.bf16.msra.mxu0 %v504
        %582 = vmatprep.subr.bf16.mxu0 0
        %583 = vmatpush1.bf16.msra.mxu0 %v505
        %584 = vmatprep.subr.bf16.mxu0 0
        %585 = vmatpush1.bf16.msra.mxu0 %v506
        %586 = vmatprep.subr.bf16.mxu0 0
        %587 = vmatpush1.bf16.msra.mxu0 %v507
        %588 = vmatprep.mubr.bf16.mxu0 %v357
        %589 = vmatmul.mubr.bf16.gmra.mrb[0].mxu0 %v350
        %v590 = vpop.f32.mrb[0].mxu0
        %v591 = vadd.f32 0.0, %v590
        %v592 = vpop.f32.mrb[0].mxu0
        %v593 = vpop.f32.mrb[0].mxu0
        %v594 = vpop.f32.mrb[0].mxu0
        %595 = vdwg.mxu0
        %596 = vmatprep.subr.bf16.mxu0 0
        %597 = vmatpush1.bf16.msra.mxu0 %v508
        %598 = vmatprep.subr.bf16.mxu0 0
        %599 = vmatpush1.bf16.msra.mxu0 %v509
        %600 = vmatprep.subr.bf16.mxu0 0
        %601 = vmatpush1.bf16.msra.mxu0 %v510
        %602 = vmatprep.subr.bf16.mxu0 0
        %603 = vmatpush1.bf16.msra.mxu0 %v511
        %604 = vmatprep.subr.bf16.mxu0 0
        %605 = vmatpush1.bf16.msra.mxu0 %v512
        %606 = vmatprep.subr.bf16.mxu0 0
        %607 = vmatpush1.bf16.msra.mxu0 %v513
        %608 = vmatprep.subr.bf16.mxu0 0
        %609 = vmatpush1.bf16.msra.mxu0 %v514
        %610 = vmatprep.subr.bf16.mxu0 0
        %611 = vmatpush1.bf16.msra.mxu0 %v515
        %612 = vmatprep.subr.bf16.mxu0 0
        %613 = vmatpush1.bf16.msra.mxu0 %v516
        %614 = vmatprep.subr.bf16.mxu0 0
        %615 = vmatpush1.bf16.msra.mxu0 %v517
        %616 = vmatprep.subr.bf16.mxu0 0
        %617 = vmatpush1.bf16.msra.mxu0 %v518
        %618 = vmatprep.subr.bf16.mxu0 0
        %619 = vmatpush1.bf16.msra.mxu0 %v519
        %620 = vmatprep.subr.bf16.mxu0 0
        %621 = vmatpush1.bf16.msra.mxu0 %v520
        %622 = vmatprep.subr.bf16.mxu0 0
        %623 = vmatpush1.bf16.msra.mxu0 %v521
        %624 = vmatprep.subr.bf16.mxu0 0
        %625 = vmatpush1.bf16.msra.mxu0 %v522
        %626 = vmatprep.subr.bf16.mxu0 0
        %627 = vmatpush1.bf16.msra.mxu0 %v523
        %628 = vmatprep.mubr.bf16.mxu0 %v359
        %629 = vmatmul.mubr.bf16.gmra.mrb[0].mxu0 %v358
        %v630 = vpop.f32.mrb[0].mxu0
        %v631 = vadd.f32 %v591, %v630
        %v632 = vpop.f32.mrb[0].mxu0
        %v633 = vpop.f32.mrb[0].mxu0
        %v634 = vpop.f32.mrb[0].mxu0
        %635 = vdwg.mxu0
        %v636 = vadd.f32 %v269, %v631
        %637 = vst [vmem:[#allocation2] sm:$0x3] %v636
        %p638 = scmp.eq.s32.totalorder %s22, 1
        // Predicated region
        $region45: #{cnn_forward.3} parent=39 // pred_check
          %p639 = pneg %p638
        $region46: #{cnn_forward.3} parent=39 // pred_check_branch
          %641 = sbr.rel (%p639) target = $region48
        $region47: #{cnn_forward.3} parent=39 // pred_region
          %v642 = vld [vmem:[#allocation2] sm:$0x3]
          %v643 = vld [vmem:[%s2] sm:$0x1]
          %v645 = vlaneseq
          %v646 = vshrl.u32 %v645, 7
          %v647 = vsub.s32 0, %v646
          %v648 = vrot.slane %v643, %v647
          %v650 = vadd.f32 %v642, %v648
          %vm651 = vcmp.ge.f32.partialorder %v650, 0.0
          %v652 = vmul.f32 %v650, 0.9
          %v653 = vsel %vm651, %v650, %v652
          %v654 = vpack.c.bf16 %v653, %v653
          %v655 = vld [vmem:[%s3] sm:$0xf]
          %v656 = vld [vmem:[%s3 + $0x4] sm:$0xf]
          %v657 = vld [vmem:[%s3 + $0x8] sm:$0xf]
          %v658 = vld [vmem:[%s3 + $0xc] sm:$0xf]
          %v659 = vld [vmem:[%s3 + $0x10] sm:$0xf]
          %v660 = vld [vmem:[%s3 + $0x14] sm:$0xf]
          %v661 = vld [vmem:[%s3 + $0x18] sm:$0xf]
          %v662 = vld [vmem:[%s3 + $0x1c] sm:$0xf]
          %v663 = vld [vmem:[%s3 + $0x20] sm:$0xf]
          %v664 = vld [vmem:[%s3 + $0x24] sm:$0xf]
          %v665 = vld [vmem:[%s3 + $0x28] sm:$0xf]
          %v666 = vld [vmem:[%s3 + $0x2c] sm:$0xf]
          %v667 = vld [vmem:[%s3 + $0x30] sm:$0xf]
          %v668 = vld [vmem:[%s3 + $0x34] sm:$0xf]
          %v669 = vld [vmem:[%s3 + $0x38] sm:$0xf]
          %v670 = vld [vmem:[%s3 + $0x3c] sm:$0xf]
          %v671 = vld [vmem:[%s4] sm:$0x1]
          %v673 = vlaneseq
          %v674 = vshrl.u32 %v673, 7
          %v675 = vsub.s32 0, %v674
          %v676 = vrot.slane %v671, %v675
          %v694 = vunpack.c.l.b16 %v655
          %v695 = vunpack.c.l.b16 %v656
          %v696 = vunpack.c.l.b16 %v657
          %v697 = vunpack.c.l.b16 %v658
          %v698 = vunpack.c.l.b16 %v659
          %v699 = vunpack.c.l.b16 %v660
          %v700 = vunpack.c.l.b16 %v661
          %v701 = vunpack.c.l.b16 %v662
          %v702 = vunpack.c.l.b16 %v663
          %v703 = vunpack.c.l.b16 %v664
          %v704 = vunpack.c.l.b16 %v665
          %v705 = vunpack.c.l.b16 %v666
          %v706 = vunpack.c.l.b16 %v667
          %v707 = vunpack.c.l.b16 %v668
          %v708 = vunpack.c.l.b16 %v669
          %v709 = vunpack.c.l.b16 %v670
          %v710 = vpack.c.b16 %v695, %v694
          %v711 = vpack.c.b16 %v697, %v696
          %v712 = vpack.c.b16 %v699, %v698
          %v713 = vpack.c.b16 %v701, %v700
          %v714 = vpack.c.b16 %v703, %v702
          %v715 = vpack.c.b16 %v705, %v704
          %v716 = vpack.c.b16 %v707, %v706
          %v717 = vpack.c.b16 %v709, %v708
          %726 = vmatprep.subr.bf16.mxu0 0
          %727 = vmatpush1.bf16.msra.mxu0 %v710
          %728 = vmatprep.subr.bf16.mxu0 0
          %729 = vmatpush1.bf16.msra.mxu0 %v711
          %730 = vmatprep.subr.bf16.mxu0 0
          %731 = vmatpush1.bf16.msra.mxu0 %v712
          %732 = vmatprep.subr.bf16.mxu0 0
          %733 = vmatpush1.bf16.msra.mxu0 %v713
          %734 = vmatprep.subr.bf16.mxu0 0
          %735 = vmatpush1.bf16.msra.mxu0 %v714
          %736 = vmatprep.subr.bf16.mxu0 0
          %737 = vmatpush1.bf16.msra.mxu0 %v715
          %738 = vmatprep.subr.bf16.mxu0 0
          %739 = vmatpush1.bf16.msra.mxu0 %v716
          %740 = vmatprep.subr.bf16.mxu0 0
          %741 = vmatpush1.bf16.msra.mxu0 %v717
          %742 = vmatprep.subr.bf16.mxu0 0
          %743 = vmatpush1.bf16.msra.mxu0 0
          %744 = vmatprep.subr.bf16.mxu0 0
          %745 = vmatpush1.bf16.msra.mxu0 0
          %746 = vmatprep.subr.bf16.mxu0 0
          %747 = vmatpush1.bf16.msra.mxu0 0
          %748 = vmatprep.subr.bf16.mxu0 0
          %749 = vmatpush1.bf16.msra.mxu0 0
          %750 = vmatprep.subr.bf16.mxu0 0
          %751 = vmatpush1.bf16.msra.mxu0 0
          %752 = vmatprep.subr.bf16.mxu0 0
          %753 = vmatpush1.bf16.msra.mxu0 0
          %754 = vmatprep.subr.bf16.mxu0 0
          %755 = vmatpush1.bf16.msra.mxu0 0
          %756 = vmatprep.subr.bf16.mxu0 0
          %757 = vmatpush1.bf16.msra.mxu0 0
          %758 = vmatprep.mubr.bf16.mxu0 0
          %759 = vmatmul.mubr.bf16.gmra.mrb[0].mxu0 %v654
          %v760 = vpop.f32.mrb[0].mxu0
          %v761 = vadd.f32 %v676, %v760
          %v762 = vpop.f32.mrb[0].mxu0
          %v763 = vpop.f32.mrb[0].mxu0
          %v764 = vpop.f32.mrb[0].mxu0
          %765 = vdwg.mxu0
          %vm766 = vcmp.ge.f32.partialorder %v761, 0.0
          %v767 = vmul.f32 %v761, 0.9
          %v768 = vsel %vm766, %v761, %v767
          %v769 = vlaneseq
          %v770 = vand.u32 %v769, 127
          %vm771 = vcmp.lt.s32.totalorder %v770, 10
          %v772 = vsel %vm771, %v768, -1e+30
          %vm773 = vcmask 1041408
          %v774 = vsel %vm773, %v772, -inf
          %775 = vmax.xlane.f32.xlu0 %v774
          %v776 = vpop.xlane.xlu0 %775
          %v777 = vsub.f32 %v772, %v776
          %v778 = vmul.f32 %v777, 1.442695
          %v779 = vpow.pop %v778
          %v780 = vsel %vm773, %v779, 0.0
          %781 = vadd.xlane.f32.xlu0 %v780
          %v782 = vpop.xlane.xlu0 %781
          %v783 = vlog2.pop %v782
          %v784 = vmul.f32 %v783, 0.6931472
          %v785 = vadd.f32 %v776, %v784
          %v786 = vsub.f32 %v772, %v785
          %787 = vst [vmem:[#allocation3] sm:$0x3] %v786
        $region48: #{cnn_forward.3} parent=39 // pred_fallthru
          _
        // Predicated region
        $region49: #{cnn_forward.3} parent=39 // pred_check
          %p788 = pneg %p164
        $region50: #{cnn_forward.3} parent=39 // pred_check_branch
          %790 = sbr.rel (%p788) target = $region52
        $region51: #{cnn_forward.3} parent=39 // pred_region
          %s792 = ssub.s32 32, 32
          %793 = vsyncadd [#allocation4], %s792
          %s794 = smul.addr %s21, 32
          %s795 = scalar_lea.hbm %s5, %s794
          %s797 = sshll.u32 [#allocation3], 4
          %s798 = int_to_ptr.vmem [resolvable:$true] %s797
          %800 = dma.vmem_to_hbm [thread:$0]  %s798, 32, %s795, [#allocation4]
        $region52: #{cnn_forward.3} parent=39 // pred_fallthru
          _
        // Predicated region
        $region53: #{cnn_forward.3} parent=39 // pred_check
          %p801 = pneg %p164
        $region54: #{cnn_forward.3} parent=39 // pred_check_branch
          %803 = sbr.rel (%p801) target = $region56
        $region55: #{cnn_forward.3} parent=39 // pred_region
          %804 = dma.done [#allocation4], 32
        $region56: #{cnn_forward.3} parent=39 // pred_fallthru
          _
      $region40: #{cnn_forward.3} parent=5 // pred_fallthru
        _
      %p805 = scmp.le.s32.totalorder 2, %s12
      // Predicated region
      $region57: #{cnn_forward.3} parent=5 // pred_check
        %p806 = pneg %p805
      $region58: #{cnn_forward.3} parent=5 // pred_check_branch
        %808 = sbr.rel (%p806) target = $region60
      $region59: #{cnn_forward.3} parent=5 // pred_region
        %s809 = ssub.s32 %s12, 2
      $region60: #{cnn_forward.3} parent=5 // pred_fallthru
        _
    $region6: #{cnn_forward.3} parent=1 // loop_footer
      %s16 = sadd.s32 1, %s12
    $region7: #{cnn_forward.3} parent=1 // loop_footer_branch
      %11 = sbr.rel target = $region3
    $region8: #{cnn_forward.3} parent=1 // loop_exit
      _
    %810 = vsyncpa [#allocation4], 1
    %s811 = scalar_lea.sflag [#allocation4], 1
    %812 = vsyncpa %s811, 1

</llo_original>
